<compile_context>
chip_gen: v7x
topology: tpu7x:2x2x1
jax: 0.10.0
libtpu: 0.0.40
codegen_flags: <defaults>
</compile_context>

<pallas_src>
import functools

import jax
import jax.numpy as jnp
import numpy as np
from jax import lax
from jax.experimental import pallas as pl
from jax.experimental.pallas import tpu as pltpu


def _cdiv(a, b):
    return -(-a // b)


def _round_up(x, m):
    return (x + m - 1) // m * m


# ---------------------------------------------------------------------------
# Kernel: per tile of TM rows, computes intensity & hazard as lane-dense rows.
# ---------------------------------------------------------------------------
def decoder_fwd_kernel(h_ref, tcol_ref, trow_ref, w1_ref, a1_ref, pk_ref,
                       out_ref, *, minpositive):
    h = h_ref[...]                       # (TM, H)
    t_col = tcol_ref[...]                # (TM, 1)  t per row (sublane layout)
    t_row = trow_ref[...]                # (1, TM)  t per row (lane-dense layout)
    W1 = w1_ref[...]                     # (H, H)   hazard_nn_h1 weight
    A1 = a1_ref[...]                     # (H, H)   hazard_nn layer 0 weight (>=0)
    P = pk_ref[...]                      # (8, H)   packed small params / projections

    # packed rows: 0 = A2.T (>=0), 1 = wr.T, 2 = b1, 3 = wt (>=0), 4 = c1 (>=0),
    #              5 = [br, 0, ...], 6-7 = zeros
    b1 = P[2:3, :]                       # (1, H)
    wt = P[3:4, :]                       # (1, H)
    c1 = P[4:5, :]                       # (1, H)
    br = P[5:6, 0:1]                     # (1, 1)

    def rowdot(w, x):
        # (8,H)·(M,H)ᵀ -> (8,M): contraction over H of both operands, so the
        # per-row scalars come out lane-dense.  Unused rows of `w` are simply
        # discarded result rows (the MXU pass covers >= 8 rows anyway).
        return lax.dot_general(w, x, (((1,), (1,)), ((), ())),
                               preferred_element_type=jnp.float32)

    # shared first linear: h2 = hazard_nn_h1(h)
    h2 = jnp.dot(h, W1, preferred_element_type=jnp.float32) + b1          # (TM, H)

    ht2_t = jnp.tanh(h2 + wt * t_col)        # tanh(h2 + wt * t)
    ht2_0 = jnp.tanh(h2)                     # tanh(h2 + wt * 0)
    du_t = (1.0 - ht2_t * ht2_t) * wt        # d(ht2_t)/dt

    # three matmuls against the resident A1 (no concatenate staging copies)
    z_t = jnp.dot(ht2_t, A1, preferred_element_type=jnp.float32)
    z_0 = jnp.dot(ht2_0, A1, preferred_element_type=jnp.float32)
    z_d = jnp.dot(du_t, A1, preferred_element_type=jnp.float32)

    a1_t = jnp.tanh(z_t + c1)
    a1_0 = jnp.tanh(z_0 + c1)
    da1_t = (1.0 - a1_t * a1_t) * z_d        # d(a1_t)/dt

    # lane-dense per-row scalars via the single packed projection weight:
    out_diff = rowdot(P, a1_t - a1_0)[0:1, :]     # (a1_t - a1_0) @ A2  (c2 cancels)
    dout_t = rowdot(P, da1_t)[0:1, :]             # da1_t @ A2
    res = rowdot(P, h)[1:2, :] + br               # h @ wr + br
    relu_res = jnp.maximum(res, 0.0)

    out_ref[0:1, :] = relu_res + dout_t + minpositive        # intensity
    out_ref[1:2, :] = relu_res * t_row + out_diff            # hazard


# ---------------------------------------------------------------------------
# Wrapper: make_pos, parameter packing, tiling, pallas_call.
# ---------------------------------------------------------------------------
def decoder_forward(h, t, params, *, minpositive=1e-6, tm=2048):
    """h: (bs, seq, H) f32,  t: (bs, seq) f32  ->  (intensity (bs,seq), hazard (bs,seq,1))."""
    bs, seq, H = h.shape
    N = bs * seq

    # make_pos(): clamp hazard_nn_t1 and all hazard_nn params to >= 0 (glue).
    wt = params["wt"] * (params["wt"] >= 0)
    A1 = params["A1"] * (params["A1"] >= 0)
    c1 = params["c1"] * (params["c1"] >= 0)
    A2 = params["A2"] * (params["A2"] >= 0)
    # c2 (hazard_nn output bias) cancels in (hazardt - hazard0) and has no t-gradient.

    # One packed (8, H) block: rows 0/1 are the merged A2/wr row-dot weight, rows
    # 2-5 carry the small biases.  Cuts 5 tiny input streams down to 1.
    pk = jnp.zeros((8, H), jnp.float32)
    pk = pk.at[0, :].set(A2[:, 0].astype(jnp.float32))
    pk = pk.at[1, :].set(params["wr"][:, 0].astype(jnp.float32))
    pk = pk.at[2, :].set(params["b1"].reshape(H).astype(jnp.float32))
    pk = pk.at[3, :].set(wt.reshape(H).astype(jnp.float32))
    pk = pk.at[4, :].set(c1.reshape(H).astype(jnp.float32))
    pk = pk.at[5, 0].set(params["br"].reshape(()).astype(jnp.float32))

    # Tile selection: large tiles amortize the ~600-cycle per-grid-step overhead,
    # but cap so the grid has >= 2 steps when N allows (v7x: 2 TensorCores).
    tm_eff = max(128, min(_round_up(tm, 128), _round_up(_cdiv(N, 2), 128)))
    grid = _cdiv(N, tm_eff)          # ragged last block: OOB reads undefined (row-
                                     # independent math), OOB writes dropped.

    # All of these are metadata-only views: no padded HBM copy of h or t.
    h_flat = h.reshape(N, H).astype(jnp.float32)
    t_flat = t.reshape(N).astype(jnp.float32)
    t_col = t_flat.reshape(N, 1)     # sublane layout for the wt * t broadcast
    t_row = t_flat.reshape(1, N)     # lane-dense layout for the final combine

    full2d = lambda i: (0, 0)        # parameters: whole array every step
    kernel = functools.partial(decoder_fwd_kernel, minpositive=minpositive)

    out = pl.pallas_call(
        kernel,
        out_shape=jax.ShapeDtypeStruct((2, N), jnp.float32),
        grid_spec=pltpu.PrefetchScalarGridSpec(
            num_scalar_prefetch=0,
            grid=(grid,),
            in_specs=[
                pl.BlockSpec((tm_eff, H), lambda i: (i, 0)),    # h
                pl.BlockSpec((tm_eff, 1), lambda i: (i, 0)),    # t (column)
                pl.BlockSpec((1, tm_eff), lambda i: (0, i)),    # t (lane-dense row)
                pl.BlockSpec((H, H), full2d),                   # W1
                pl.BlockSpec((H, H), full2d),                   # A1
                pl.BlockSpec((8, H), full2d),                   # packed small params
            ],
            out_specs=pl.BlockSpec((2, tm_eff), lambda i: (0, i)),
        ),
        compiler_params=pltpu.CompilerParams(
            dimension_semantics=("parallel",),
            # ~5 MiB working set at tm=2048/H=32; 32 MiB is safe on v5e/v6e/v7x.
            vmem_limit_bytes=32 * 1024 * 1024,
        ),
    )(h_flat, t_col, t_row,
      params["W1"].astype(jnp.float32), A1.astype(jnp.float32), pk)

    intensity = out[0, :].reshape(bs, seq)
    hazard = out[1, :].reshape(bs, seq, 1)
    return intensity, hazard


# ---------------------------------------------------------------------------
# Pure-JAX reference (mirrors the torch code, grad via jax.grad) for checking.
# ---------------------------------------------------------------------------
def _reference(h, t, params, minpositive):
    wt = params["wt"] * (params["wt"] >= 0)
    A1 = params["A1"] * (params["A1"] >= 0)
    c1 = params["c1"] * (params["c1"] >= 0)
    A2 = params["A2"] * (params["A2"] >= 0)
    c2 = params["c2"] * (params["c2"] >= 0)

    def get_hazard(h, t):                       # t: (bs, seq)
        t4 = t[:, :, None, None]                # (bs, seq, 1, 1)
        h2 = h @ params["W1"] + params["b1"]    # (bs, seq, H)
        t2 = wt.reshape(1, 1, 1, -1) * t4       # (bs, seq, 1, H)
        ht2 = jnp.tanh(h2[:, :, None, :] + t2)  # (bs, seq, 1, H)
        a1 = jnp.tanh(ht2 @ A1 + c1)
        out = a1 @ A2 + c2                      # (bs, seq, 1, 1)
        res = h @ params["wr"] + params["br"]   # (bs, seq, 1)
        residual = jnp.maximum(res[..., -1:], 0.0)[:, :, None, :] * t4
        return residual + out

    def hazard_sum(t):
        return jnp.sum(get_hazard(h, t) - get_hazard(h, jnp.zeros_like(t)))

    hazard = (get_hazard(h, t) - get_hazard(h, jnp.zeros_like(t)))[..., 0]  # (bs,seq,1)
    intensity = jax.grad(hazard_sum)(t) + minpositive                        # (bs,seq)
    return intensity, hazard


# ---------------------------------------------------------------------------
def make_params(key, hdim):
    ks = jax.random.split(key, 10)
    u = lambda k, shape, lim: jax.random.uniform(k, shape, jnp.float32, -lim, lim)
    lim = 1.0 / np.sqrt(hdim)
    return {
        # hazard_nn_h1: Linear(H, H)     (stored as (in, out))
        "W1": u(ks[0], (hdim, hdim), lim), "b1": u(ks[1], (1, hdim), lim),
        # hazard_nn_t1: torch.rand(H)  -> uniform [0, 1)
        "wt": jax.random.uniform(ks[2], (1, hdim), jnp.float32, 0.0, 1.0),
        # hazard_nn: MLP [H, H, 1]
        "A1": u(ks[3], (hdim, hdim), lim), "c1": u(ks[4], (1, hdim), lim),
        "A2": u(ks[5], (hdim, 1), lim),    "c2": u(ks[6], (1, 1), lim),
        # residual_nn: Linear(H, 1)
        "wr": u(ks[7], (hdim, 1), lim),    "br": u(ks[8], (1, 1), lim),
    }
    # TODO(synk): type_nn / time_nn (used only in ll/prediction, not in forward)
    #             are not instantiated here.


def _check(bs, seq, hdim, key, minpositive):
    kh, kt, kp = jax.random.split(key, 3)
    h = jax.random.normal(kh, (bs, seq, hdim), jnp.float32)
    t = jax.random.uniform(kt, (bs, seq), jnp.float32, 0.0, 2.0)
    params = make_params(kp, hdim)

    intensity, hazard = decoder_forward(h, t, params, minpositive=minpositive)
    jax.block_until_ready((intensity, hazard))

    ref_intensity, ref_hazard = _reference(h, t, params, minpositive)
    np.testing.assert_allclose(np.asarray(intensity), np.asarray(ref_intensity),
                               rtol=1e-5, atol=1e-5)
    np.testing.assert_allclose(np.asarray(hazard), np.asarray(ref_hazard),
                               rtol=1e-5, atol=1e-5)


if __name__ == "__main__":
    key = jax.random.PRNGKey(0)
    k1, k2, k3 = jax.random.split(key, 3)

    # Tiny shape consistent with the module (N=16 rows, single 128-row block).
    _check(bs=2, seq=8, hdim=32, key=k1, minpositive=1e-6)
    # N=768 -> tm=384, grid=2 (exercises the 2-step parallel grid, exact fit).
    _check(bs=2, seq=384, hdim=32, key=k2, minpositive=1e-6)
    # N=300 -> tm=256, grid=2 with a ragged last block (exercises OOB clipping).
    _check(bs=3, seq=100, hdim=32, key=k3, minpositive=1e-6)

    print("KERNEL_OK")
</pallas_src>

<mosaic_0001>
module attributes {stable_mosaic.version = 11 : i64} {
  func.func @decoder_fwd_kernel(%arg0: i32, %arg1: memref<128x32xf32, #tpu.memory_space<vmem>>, %arg2: memref<128x1xf32, #tpu.memory_space<vmem>>, %arg3: memref<1x128xf32, #tpu.memory_space<vmem>>, %arg4: memref<32x32xf32, #tpu.memory_space<vmem>>, %arg5: memref<32x32xf32, #tpu.memory_space<vmem>>, %arg6: memref<8x32xf32, #tpu.memory_space<vmem>>, %arg7: memref<2x128xf32, #tpu.memory_space<vmem>>) attributes {dimension_semantics = [#tpu.dimension_semantics<parallel>], iteration_bounds = array<i64: 1>, scalar_prefetch = 0 : i64, scratch_operands = 0 : i64, tpu.core_type = #tpu.core_type<tc>, window_params = [{transform_indices = @transform_0, window_bounds = array<i64: 128, 32>}, {transform_indices = @transform_1, window_bounds = array<i64: 128, 1>}, {transform_indices = @transform_2, window_bounds = array<i64: 1, 128>}, {pipeline_mode = #tpu.pipeline_mode<synchronous>, transform_indices = @transform_3, window_bounds = array<i64: 32, 32>}, {pipeline_mode = #tpu.pipeline_mode<synchronous>, transform_indices = @transform_4, window_bounds = array<i64: 32, 32>}, {pipeline_mode = #tpu.pipeline_mode<synchronous>, transform_indices = @transform_5, window_bounds = array<i64: 8, 32>}, {transform_indices = @transform_6, window_bounds = array<i64: 2, 128>}]} {
    %c0 = arith.constant 0 : index
    %c0_0 = arith.constant 0 : index
    %0 = vector.load %arg1[%c0, %c0_0] : memref<128x32xf32, #tpu.memory_space<vmem>>, vector<128x32xf32>
    %c0_1 = arith.constant 0 : index
    %c0_2 = arith.constant 0 : index
    %1 = vector.load %arg2[%c0_1, %c0_2] : memref<128x1xf32, #tpu.memory_space<vmem>>, vector<128x1xf32>
    %c0_3 = arith.constant 0 : index
    %c0_4 = arith.constant 0 : index
    %2 = vector.load %arg3[%c0_3, %c0_4] : memref<1x128xf32, #tpu.memory_space<vmem>>, vector<1x128xf32>
    %c0_5 = arith.constant 0 : index
    %c0_6 = arith.constant 0 : index
    %3 = vector.load %arg4[%c0_5, %c0_6] : memref<32x32xf32, #tpu.memory_space<vmem>>, vector<32x32xf32>
    %c0_7 = arith.constant 0 : index
    %c0_8 = arith.constant 0 : index
    %4 = vector.load %arg5[%c0_7, %c0_8] : memref<32x32xf32, #tpu.memory_space<vmem>>, vector<32x32xf32>
    %c0_9 = arith.constant 0 : index
    %c0_10 = arith.constant 0 : index
    %5 = vector.load %arg6[%c0_9, %c0_10] : memref<8x32xf32, #tpu.memory_space<vmem>>, vector<8x32xf32>
    %6 = vector.extract_strided_slice %5 {offsets = [2, 0], sizes = [1, 32], strides = [1, 1]} : vector<8x32xf32> to vector<1x32xf32>
    %7 = vector.extract_strided_slice %5 {offsets = [3, 0], sizes = [1, 32], strides = [1, 1]} : vector<8x32xf32> to vector<1x32xf32>
    %8 = vector.extract_strided_slice %5 {offsets = [4, 0], sizes = [1, 32], strides = [1, 1]} : vector<8x32xf32> to vector<1x32xf32>
    %9 = vector.extract_strided_slice %5 {offsets = [5, 0], sizes = [1, 1], strides = [1, 1]} : vector<8x32xf32> to vector<1x1xf32>
    %cst = arith.constant dense<0.000000e+00> : vector<128x32xf32>
    %10 = tpu.matmul %0, %3, %cst {dimension_numbers = #tpu.dot_dimension_numbers<[1], [0], [0], [1], [0, 0, 1, 1], [], []>} : vector<128x32xf32>, vector<32x32xf32>, vector<128x32xf32> -> vector<128x32xf32>
    %11 = vector.broadcast %6 : vector<1x32xf32> to vector<128x32xf32>
    %12 = arith.addf %10, %11 : vector<128x32xf32>
    %13 = vector.broadcast %7 : vector<1x32xf32> to vector<128x32xf32>
    %14 = vector.broadcast %1 : vector<128x1xf32> to vector<128x32xf32>
    %15 = arith.mulf %13, %14 : vector<128x32xf32>
    %16 = arith.addf %12, %15 : vector<128x32xf32>
    %17 = math.tanh %16 : vector<128x32xf32>
    %18 = math.tanh %12 : vector<128x32xf32>
    %19 = arith.mulf %17, %17 : vector<128x32xf32>
    %cst_11 = arith.constant 1.000000e+00 : f32
    %20 = vector.broadcast %cst_11 : f32 to vector<128x32xf32>
    %21 = arith.subf %20, %19 : vector<128x32xf32>
    %22 = vector.broadcast %7 : vector<1x32xf32> to vector<128x32xf32>
    %23 = arith.mulf %21, %22 : vector<128x32xf32>
    %cst_12 = arith.constant dense<0.000000e+00> : vector<128x32xf32>
    %24 = tpu.matmul %17, %4, %cst_12 {dimension_numbers = #tpu.dot_dimension_numbers<[1], [0], [0], [1], [0, 0, 1, 1], [], []>} : vector<128x32xf32>, vector<32x32xf32>, vector<128x32xf32> -> vector<128x32xf32>
    %cst_13 = arith.constant dense<0.000000e+00> : vector<128x32xf32>
    %25 = tpu.matmul %18, %4, %cst_13 {dimension_numbers = #tpu.dot_dimension_numbers<[1], [0], [0], [1], [0, 0, 1, 1], [], []>} : vector<128x32xf32>, vector<32x32xf32>, vector<128x32xf32> -> vector<128x32xf32>
    %cst_14 = arith.constant dense<0.000000e+00> : vector<128x32xf32>
    %26 = tpu.matmul %23, %4, %cst_14 {dimension_numbers = #tpu.dot_dimension_numbers<[1], [0], [0], [1], [0, 0, 1, 1], [], []>} : vector<128x32xf32>, vector<32x32xf32>, vector<128x32xf32> -> vector<128x32xf32>
    %27 = vector.broadcast %8 : vector<1x32xf32> to vector<128x32xf32>
    %28 = arith.addf %24, %27 : vector<128x32xf32>
    %29 = math.tanh %28 : vector<128x32xf32>
    %30 = vector.broadcast %8 : vector<1x32xf32> to vector<128x32xf32>
    %31 = arith.addf %25, %30 : vector<128x32xf32>
    %32 = math.tanh %31 : vector<128x32xf32>
    %33 = arith.mulf %29, %29 : vector<128x32xf32>
    %cst_15 = arith.constant 1.000000e+00 : f32
    %34 = vector.broadcast %cst_15 : f32 to vector<128x32xf32>
    %35 = arith.subf %34, %33 : vector<128x32xf32>
    %36 = arith.mulf %35, %26 : vector<128x32xf32>
    %37 = arith.subf %29, %32 : vector<128x32xf32>
    %cst_16 = arith.constant dense<0.000000e+00> : vector<8x128xf32>
    %38 = tpu.matmul %5, %37, %cst_16 {dimension_numbers = #tpu.dot_dimension_numbers<[1], [1], [0], [0], [0, 0, 1, 0], [], []>} : vector<8x32xf32>, vector<128x32xf32>, vector<8x128xf32> -> vector<8x128xf32>
    %39 = vector.extract_strided_slice %38 {offsets = [0, 0], sizes = [1, 128], strides = [1, 1]} : vector<8x128xf32> to vector<1x128xf32>
    %cst_17 = arith.constant dense<0.000000e+00> : vector<8x128xf32>
    %40 = tpu.matmul %5, %36, %cst_17 {dimension_numbers = #tpu.dot_dimension_numbers<[1], [1], [0], [0], [0, 0, 1, 0], [], []>} : vector<8x32xf32>, vector<128x32xf32>, vector<8x128xf32> -> vector<8x128xf32>
    %41 = vector.extract_strided_slice %40 {offsets = [0, 0], sizes = [1, 128], strides = [1, 1]} : vector<8x128xf32> to vector<1x128xf32>
    %cst_18 = arith.constant dense<0.000000e+00> : vector<8x128xf32>
    %42 = tpu.matmul %5, %0, %cst_18 {dimension_numbers = #tpu.dot_dimension_numbers<[1], [1], [0], [0], [0, 0, 1, 0], [], []>} : vector<8x32xf32>, vector<128x32xf32>, vector<8x128xf32> -> vector<8x128xf32>
    %43 = vector.extract_strided_slice %42 {offsets = [1, 0], sizes = [1, 128], strides = [1, 1]} : vector<8x128xf32> to vector<1x128xf32>
    %44 = vector.broadcast %9 : vector<1x1xf32> to vector<1x128xf32>
    %45 = arith.addf %43, %44 : vector<1x128xf32>
    %cst_19 = arith.constant 0.000000e+00 : f32
    %46 = vector.broadcast %cst_19 : f32 to vector<1x128xf32>
    %47 = arith.maximumf %45, %46 : vector<1x128xf32>
    %48 = arith.addf %47, %41 : vector<1x128xf32>
    %cst_20 = arith.constant 9.99999997E-7 : f32
    %49 = vector.broadcast %cst_20 : f32 to vector<1x128xf32>
    %50 = arith.addf %48, %49 : vector<1x128xf32>
    %c0_21 = arith.constant 0 : index
    %c0_22 = arith.constant 0 : index
    %51 = vector.load %arg7[%c0_21, %c0_22] : memref<2x128xf32, #tpu.memory_space<vmem>>, vector<1x128xf32>
    tpu.vector_store %arg7[%c0_21, %c0_22], %50 {strides = array<i32>} : memref<2x128xf32, #tpu.memory_space<vmem>>, vector<1x128xf32>,
    %52 = arith.mulf %47, %2 : vector<1x128xf32>
    %53 = arith.addf %52, %39 : vector<1x128xf32>
    %c1 = arith.constant 1 : index
    %c0_23 = arith.constant 0 : index
    %54 = vector.load %arg7[%c1, %c0_23] : memref<2x128xf32, #tpu.memory_space<vmem>>, vector<1x128xf32>
    tpu.vector_store %arg7[%c1, %c0_23], %53 {strides = array<i32>} : memref<2x128xf32, #tpu.memory_space<vmem>>, vector<1x128xf32>,
    return
  }
  func.func @transform_0(%arg0: i32) -> (i32, i32) {
    %c0_i32 = arith.constant 0 : i32
    %c0_i32_0 = arith.constant 0 : i32
    return %arg0, %c0_i32 : i32, i32
  }
  func.func @transform_1(%arg0: i32) -> (i32, i32) {
    %c0_i32 = arith.constant 0 : i32
    %c0_i32_0 = arith.constant 0 : i32
    return %arg0, %c0_i32 : i32, i32
  }
  func.func @transform_2(%arg0: i32) -> (i32, i32) {
    %c0_i32 = arith.constant 0 : i32
    %c0_i32_0 = arith.constant 0 : i32
    return %c0_i32, %arg0 : i32, i32
  }
  func.func @transform_3(%arg0: i32) -> (i32, i32) {
    %c0_i32 = arith.constant 0 : i32
    %c0_i32_0 = arith.constant 0 : i32
    %c0_i32_1 = arith.constant 0 : i32
    return %c0_i32, %c0_i32_0 : i32, i32
  }
  func.func @transform_4(%arg0: i32) -> (i32, i32) {
    %c0_i32 = arith.constant 0 : i32
    %c0_i32_0 = arith.constant 0 : i32
    %c0_i32_1 = arith.constant 0 : i32
    return %c0_i32, %c0_i32_0 : i32, i32
  }
  func.func @transform_5(%arg0: i32) -> (i32, i32) {
    %c0_i32 = arith.constant 0 : i32
    %c0_i32_0 = arith.constant 0 : i32
    %c0_i32_1 = arith.constant 0 : i32
    return %c0_i32, %c0_i32_0 : i32, i32
  }
  func.func @transform_6(%arg0: i32) -> (i32, i32) {
    %c0_i32 = arith.constant 0 : i32
    %c0_i32_0 = arith.constant 0 : i32
    return %c0_i32, %arg0 : i32, i32
  }
}

</mosaic_0001>

<llo_original>
// kernel: tpu_custom_call.1
$region0: #{tpu_custom_call.1}
  #allocation0 [shape = 'u32[]', space=smem, size = 0x4, offset = 0x4, fixed_abs, tag = 'smem constant byte address 0x4 - core index']
  #allocation1 [shape = 'u32[144,128]{1,0:T(1,128)}', space=vmem, size = 0x12000, scoped, tag = 'internal scratch']
  %s0 = inlined_call_operand.hbm [shape: f32[16,32], index: 0, kind: input, shape index: {}]
  %s1 = inlined_call_operand.vmem [shape: f32[16,1], index: 1, kind: input, shape index: {}]
  %s2 = inlined_call_operand.hbm [shape: f32[1,16], index: 2, kind: input, shape index: {}]
  %s3 = inlined_call_operand.hbm [shape: f32[32,32], index: 3, kind: input, shape index: {}]
  %s4 = inlined_call_operand.vmem [shape: f32[32,32], index: 4, kind: input, shape index: {}]
  %s5 = inlined_call_operand.hbm [shape: f32[8,32], index: 5, kind: input, shape index: {}]
  %s6 = inlined_call_operand.hbm [shape: f32[2,16], index: 6, kind: output, shape index: {}]
  %s7 = sld [smem:[#allocation0]]
  $region50: #{tpu_custom_call.1} parent=0
    _
  %s9 = ssub.s32 1, %s7
  %s10 = scalar_select 0, %s9, %s7
  $region1: #{tpu_custom_call.1} parent=0
    #allocation2 [shape = 'u8[65536]{0}', space=vmem, size = 0x10000, scoped, tag = 'input window, operand 0, single buffered']
    #allocation3 [shape = 's32[1]{0}', space=sflag, size = 0x4, scoped, tag = 'scoped memory for tpu_custom_call.1']
    #allocation4 [shape = 's32[1]{0}', space=sflag, size = 0x4, scoped, tag = 'scoped memory for tpu_custom_call.1']
    #allocation5 [shape = 'u8[512]{0}', space=vmem, size = 0x400, scoped, tag = 'input window, operand 2, single buffered']
    #allocation6 [shape = 's32[1]{0}', space=sflag, size = 0x4, scoped, tag = 'scoped memory for tpu_custom_call.1']
    #allocation7 [shape = 'u8[16384]{0}', space=vmem, size = 0x4000, scoped, tag = 'input window, operand 3, single buffered']
    #allocation8 [shape = 'u8[4096]{0}', space=vmem, size = 0x1000, scoped, tag = 'input window, operand 5, single buffered']
    #allocation9 [shape = 's32[1]{0}', space=sflag, size = 0x4, scoped, tag = 'scoped memory for tpu_custom_call.1']
    #allocation10 [shape = 'u8[1024]{0}', space=vmem, size = 0x400, scoped, tag = 'output window, operand 0, single buffered']
    %11 = vsyncpa [#allocation3], 0
    %12 = vsyncpa [#allocation6], 0
    %13 = vsyncpa [#allocation9], 0
    %14 = vsyncpa [#allocation4], 0
    // Predicated region
    $region2: #{tpu_custom_call.1} parent=1 // pred_check
      _
    $region3: #{tpu_custom_call.1} parent=1 // pred_check_branch
      %16 = sbr.rel (0) target = $region5
    $region4: #{tpu_custom_call.1} parent=1 // pred_region
      %s18 = ssub.s32 2048, 256
      %19 = vsyncadd [#allocation3], %s18
      %s20 = sshll.u32 [#allocation2], 4
      %s21 = int_to_ptr.vmem [resolvable:$true] %s20
      %26 = dma.hbm_to_vmem [thread:$0]  %s0, 256, %s21, [#allocation3], 128, 128, 8
    $region5: #{tpu_custom_call.1} parent=1 // pred_fallthru
      _
    // Predicated region
    $region6: #{tpu_custom_call.1} parent=1 // pred_check
      _
    $region7: #{tpu_custom_call.1} parent=1 // pred_check_branch
      %28 = sbr.rel (0) target = $region9
    $region8: #{tpu_custom_call.1} parent=1 // pred_region
      _
    $region9: #{tpu_custom_call.1} parent=1 // pred_fallthru
      _
    // Predicated region
    $region10: #{tpu_custom_call.1} parent=1 // pred_check
      _
    $region11: #{tpu_custom_call.1} parent=1 // pred_check_branch
      %30 = sbr.rel (0) target = $region13
    $region12: #{tpu_custom_call.1} parent=1 // pred_region
      %s32 = ssub.s32 16, 16
      %33 = vsyncadd [#allocation6], %s32
      %s35 = sshll.u32 [#allocation5], 4
      %s36 = int_to_ptr.vmem [resolvable:$true] %s35
      %38 = dma.hbm_to_vmem [thread:$0]  %s2, 16, %s36, [#allocation6]
    $region13: #{tpu_custom_call.1} parent=1 // pred_fallthru
      _
    // Predicated region
    $region14: #{tpu_custom_call.1} parent=1 // pred_check
      _
    $region15: #{tpu_custom_call.1} parent=1 // pred_check_branch
      %40 = sbr.rel (0) target = $region17
    $region16: #{tpu_custom_call.1} parent=1 // pred_region
      %s42 = ssub.s32 512, 512
      %43 = vsyncadd [#allocation6], %s42
      %s44 = sshll.u32 [#allocation7], 4
      %s45 = int_to_ptr.vmem [resolvable:$true] %s44
      %50 = dma.hbm_to_vmem [thread:$0]  %s3, 512, %s45, [#allocation6], 128, 128, 8
    $region17: #{tpu_custom_call.1} parent=1 // pred_fallthru
      _
    // Predicated region
    $region18: #{tpu_custom_call.1} parent=1 // pred_check
      _
    $region19: #{tpu_custom_call.1} parent=1 // pred_check_branch
      %52 = sbr.rel (0) target = $region21
    $region20: #{tpu_custom_call.1} parent=1 // pred_region
      _
    $region21: #{tpu_custom_call.1} parent=1 // pred_fallthru
      _
    // Predicated region
    $region22: #{tpu_custom_call.1} parent=1 // pred_check
      _
    $region23: #{tpu_custom_call.1} parent=1 // pred_check_branch
      %54 = sbr.rel (0) target = $region25
    $region24: #{tpu_custom_call.1} parent=1 // pred_region
      %s56 = ssub.s32 128, 128
      %57 = vsyncadd [#allocation9], %s56
      %s59 = sshll.u32 [#allocation8], 4
      %s60 = int_to_ptr.vmem [resolvable:$true] %s59
      %62 = dma.hbm_to_vmem [thread:$0]  %s5, 128, %s60, [#allocation9]
    $region25: #{tpu_custom_call.1} parent=1 // pred_fallthru
      _
    // Predicated region
    $region26: #{tpu_custom_call.1} parent=1 // pred_check
      _
    $region27: #{tpu_custom_call.1} parent=1 // pred_check_branch
      %64 = sbr.rel (0) target = $region29
    $region28: #{tpu_custom_call.1} parent=1 // pred_region
      %65 = dma.done [#allocation3], 2048
    $region29: #{tpu_custom_call.1} parent=1 // pred_fallthru
      _
    // Predicated region
    $region30: #{tpu_custom_call.1} parent=1 // pred_check
      _
    $region31: #{tpu_custom_call.1} parent=1 // pred_check_branch
      %67 = sbr.rel (0) target = $region33
    $region32: #{tpu_custom_call.1} parent=1 // pred_region
      %68 = dma.done [#allocation6], 16
    $region33: #{tpu_custom_call.1} parent=1 // pred_fallthru
      _
    // Predicated region
    $region34: #{tpu_custom_call.1} parent=1 // pred_check
      _
    $region35: #{tpu_custom_call.1} parent=1 // pred_check_branch
      %70 = sbr.rel (0) target = $region37
    $region36: #{tpu_custom_call.1} parent=1 // pred_region
      %71 = dma.done [#allocation6], 512
    $region37: #{tpu_custom_call.1} parent=1 // pred_fallthru
      _
    // Predicated region
    $region38: #{tpu_custom_call.1} parent=1 // pred_check
      _
    $region39: #{tpu_custom_call.1} parent=1 // pred_check_branch
      %73 = sbr.rel (0) target = $region41
    $region40: #{tpu_custom_call.1} parent=1 // pred_region
      %74 = dma.done [#allocation9], 128
    $region41: #{tpu_custom_call.1} parent=1 // pred_fallthru
      _
    %v75 = vld [vmem:[#allocation2] sm:$0xff]
    %v76 = vld [vmem:[#allocation2 + $0x8] sm:$0xff]
    %v77 = vld [vmem:[#allocation2 + $0x10] sm:$0xff]
    %v78 = vld [vmem:[#allocation2 + $0x18] sm:$0xff]
    %v79 = vld [vmem:[#allocation2 + $0x20] sm:$0xff]
    %v80 = vld [vmem:[#allocation2 + $0x28] sm:$0xff]
    %v81 = vld [vmem:[#allocation2 + $0x30] sm:$0xff]
    %v82 = vld [vmem:[#allocation2 + $0x38] sm:$0xff]
    %v83 = vld [vmem:[#allocation2 + $0x40] sm:$0xff]
    %v84 = vld [vmem:[#allocation2 + $0x48] sm:$0xff]
    %v85 = vld [vmem:[#allocation2 + $0x50] sm:$0xff]
    %v86 = vld [vmem:[#allocation2 + $0x58] sm:$0xff]
    %v87 = vld [vmem:[#allocation2 + $0x60] sm:$0xff]
    %v88 = vld [vmem:[#allocation2 + $0x68] sm:$0xff]
    %v89 = vld [vmem:[#allocation2 + $0x70] sm:$0xff]
    %v90 = vld [vmem:[#allocation2 + $0x78] sm:$0xff]
    %v91 = vld [vmem:[%s1] sm:$0xff]
    %v92 = vld [vmem:[%s1 + $0x8] sm:$0xff]
    %v93 = vld [vmem:[%s1 + $0x10] sm:$0xff]
    %v94 = vld [vmem:[%s1 + $0x18] sm:$0xff]
    %v95 = vld [vmem:[%s1 + $0x20] sm:$0xff]
    %v96 = vld [vmem:[%s1 + $0x28] sm:$0xff]
    %v97 = vld [vmem:[%s1 + $0x30] sm:$0xff]
    %v98 = vld [vmem:[%s1 + $0x38] sm:$0xff]
    %v99 = vld [vmem:[%s1 + $0x40] sm:$0xff]
    %v100 = vld [vmem:[%s1 + $0x48] sm:$0xff]
    %v101 = vld [vmem:[%s1 + $0x50] sm:$0xff]
    %v102 = vld [vmem:[%s1 + $0x58] sm:$0xff]
    %v103 = vld [vmem:[%s1 + $0x60] sm:$0xff]
    %v104 = vld [vmem:[%s1 + $0x68] sm:$0xff]
    %v105 = vld [vmem:[%s1 + $0x70] sm:$0xff]
    %v106 = vld [vmem:[%s1 + $0x78] sm:$0xff]
    %v107 = vld [vmem:[#allocation5] sm:$0x1]
    %v108 = vld [vmem:[#allocation7] sm:$0xff]
    %v109 = vld [vmem:[#allocation7 + $0x8] sm:$0xff]
    %v110 = vld [vmem:[#allocation7 + $0x10] sm:$0xff]
    %v111 = vld [vmem:[#allocation7 + $0x18] sm:$0xff]
    %v112 = vld [vmem:[%s4] sm:$0xff]
    %v113 = vld [vmem:[%s4 + $0x8] sm:$0xff]
    %v114 = vld [vmem:[%s4 + $0x10] sm:$0xff]
    %v115 = vld [vmem:[%s4 + $0x18] sm:$0xff]
    %v116 = vld [vmem:[#allocation8] sm:$0xff]
    %v117 = vlaneseq
    %v118 = vshrl.u32 %v117, 7
    %v119 = vsub.s32 2, %v118
    %v120 = vrot.slane %v116, %v119
    %vm121 = vcmask 261120
    %v123 = vsel %vm121, %v75, 0
    %v126 = vsel %vm121, %v76, 0
    %v129 = vsel %vm121, %v77, 0
    %v132 = vsel %vm121, %v78, 0
    %v135 = vsel %vm121, %v79, 0
    %v138 = vsel %vm121, %v80, 0
    %v141 = vsel %vm121, %v81, 0
    %v144 = vsel %vm121, %v82, 0
    %v147 = vsel %vm121, %v83, 0
    %v150 = vsel %vm121, %v84, 0
    %v153 = vsel %vm121, %v85, 0
    %v156 = vsel %vm121, %v86, 0
    %v159 = vsel %vm121, %v87, 0
    %v162 = vsel %vm121, %v88, 0
    %v165 = vsel %vm121, %v89, 0
    %v168 = vsel %vm121, %v90, 0
    %170 = vmatprep.subr.mxu0 0.0
    %171 = vmatpush1.msra.mxu0 %v108
    %172 = vmatprep.subr.mxu0 0.0
    %173 = vmatpush1.msra.mxu0 %v109
    %174 = vmatprep.subr.mxu0 0.0
    %175 = vmatpush1.msra.mxu0 %v110
    %176 = vmatprep.subr.mxu0 0.0
    %177 = vmatpush1.msra.mxu0 %v111
    %178 = vmatprep.subr.mxu0 0.0
    %179 = vmatpush1.msra.mxu0 0.0
    %180 = vmatprep.subr.mxu0 0.0
    %181 = vmatpush1.msra.mxu0 0.0
    %182 = vmatprep.subr.mxu0 0.0
    %183 = vmatpush1.msra.mxu0 0.0
    %184 = vmatprep.subr.mxu0 0.0
    %185 = vmatpush1.msra.mxu0 0.0
    %186 = vmatprep.subr.mxu0 0.0
    %187 = vmatpush1.msra.mxu0 0.0
    %188 = vmatprep.subr.mxu0 0.0
    %189 = vmatpush1.msra.mxu0 0.0
    %190 = vmatprep.subr.mxu0 0.0
    %191 = vmatpush1.msra.mxu0 0.0
    %192 = vmatprep.subr.mxu0 0.0
    %193 = vmatpush1.msra.mxu0 0.0
    %194 = vmatprep.subr.mxu0 0.0
    %195 = vmatpush1.msra.mxu0 0.0
    %196 = vmatprep.subr.mxu0 0.0
    %197 = vmatpush1.msra.mxu0 0.0
    %198 = vmatprep.subr.mxu0 0.0
    %199 = vmatpush1.msra.mxu0 0.0
    %200 = vmatprep.subr.mxu0 0.0
    %201 = vmatpush1.msra.mxu0 0.0
    %202 = vmatprep.subr.mxu0 0.0
    %203 = vmatpush1.msra.mxu0 0.0
    %204 = vmatprep.subr.mxu0 0.0
    %205 = vmatpush1.msra.mxu0 0.0
    %206 = vmatprep.subr.mxu0 0.0
    %207 = vmatpush1.msra.mxu0 0.0
    %208 = vmatprep.subr.mxu0 0.0
    %209 = vmatpush1.msra.mxu0 0.0
    %210 = vmatprep.subr.mxu0 0.0
    %211 = vmatpush1.msra.mxu0 0.0
    %212 = vmatprep.subr.mxu0 0.0
    %213 = vmatpush1.msra.mxu0 0.0
    %214 = vmatprep.subr.mxu0 0.0
    %215 = vmatpush1.msra.mxu0 0.0
    %216 = vmatprep.subr.mxu0 0.0
    %217 = vmatpush1.msra.mxu0 0.0
    %218 = vmatprep.subr.mxu0 0.0
    %219 = vmatpush1.msra.mxu0 0.0
    %220 = vmatprep.subr.mxu0 0.0
    %221 = vmatpush1.msra.mxu0 0.0
    %222 = vmatprep.subr.mxu0 0.0
    %223 = vmatpush1.msra.mxu0 0.0
    %224 = vmatprep.subr.mxu0 0.0
    %225 = vmatpush1.msra.mxu0 0.0
    %226 = vmatprep.subr.mxu0 0.0
    %227 = vmatpush1.msra.mxu0 0.0
    %228 = vmatprep.subr.mxu0 0.0
    %229 = vmatpush1.msra.mxu0 0.0
    %230 = vmatprep.subr.mxu0 0.0
    %231 = vmatpush1.msra.mxu0 0.0
    %232 = vmatprep.subr.mxu0 0.0
    %233 = vmatpush1.msra.mxu0 0.0
    %234 = vmatprep.mubr.f32.mxu0 0.0
    %235 = vmatmul.mubr.f32.gmra.mrb[0].mxu0 %v123
    %v236 = vpop.f32.mrb[0].mxu0
    %v237 = vadd.f32 %v120, %v236
    %v238 = vpop.f32.mrb[0].mxu0
    %239 = vmatprep.mubr.f32.mxu0 0.0
    %240 = vmatmul.mubr.f32.gmra.mrb[0].mxu0 %v126
    %v241 = vpop.f32.mrb[0].mxu0
    %v242 = vadd.f32 %v120, %v241
    %v243 = vpop.f32.mrb[0].mxu0
    %244 = vmatprep.mubr.f32.mxu0 0.0
    %245 = vmatmul.mubr.f32.gmra.mrb[0].mxu0 %v129
    %v246 = vpop.f32.mrb[0].mxu0
    %v247 = vadd.f32 %v120, %v246
    %v248 = vpop.f32.mrb[0].mxu0
    %249 = vmatprep.mubr.f32.mxu0 0.0
    %250 = vmatmul.mubr.f32.gmra.mrb[0].mxu0 %v132
    %v251 = vpop.f32.mrb[0].mxu0
    %v252 = vadd.f32 %v120, %v251
    %v253 = vpop.f32.mrb[0].mxu0
    %254 = vmatprep.mubr.f32.mxu0 0.0
    %255 = vmatmul.mubr.f32.gmra.mrb[0].mxu0 %v135
    %v256 = vpop.f32.mrb[0].mxu0
    %v257 = vadd.f32 %v120, %v256
    %v258 = vpop.f32.mrb[0].mxu0
    %259 = vmatprep.mubr.f32.mxu0 0.0
    %260 = vmatmul.mubr.f32.gmra.mrb[0].mxu0 %v138
    %v261 = vpop.f32.mrb[0].mxu0
    %v262 = vadd.f32 %v120, %v261
    %v263 = vpop.f32.mrb[0].mxu0
    %264 = vmatprep.mubr.f32.mxu0 0.0
    %265 = vmatmul.mubr.f32.gmra.mrb[0].mxu0 %v141
    %v266 = vpop.f32.mrb[0].mxu0
    %v267 = vadd.f32 %v120, %v266
    %v268 = vpop.f32.mrb[0].mxu0
    %269 = vmatprep.mubr.f32.mxu0 0.0
    %270 = vmatmul.mubr.f32.gmra.mrb[0].mxu0 %v144
    %v271 = vpop.f32.mrb[0].mxu0
    %v272 = vadd.f32 %v120, %v271
    %v273 = vpop.f32.mrb[0].mxu0
    %274 = vmatprep.mubr.f32.mxu0 0.0
    %275 = vmatmul.mubr.f32.gmra.mrb[0].mxu0 %v147
    %v276 = vpop.f32.mrb[0].mxu0
    %v277 = vadd.f32 %v120, %v276
    %v278 = vpop.f32.mrb[0].mxu0
    %279 = vmatprep.mubr.f32.mxu0 0.0
    %280 = vmatmul.mubr.f32.gmra.mrb[0].mxu0 %v150
    %v281 = vpop.f32.mrb[0].mxu0
    %v282 = vadd.f32 %v120, %v281
    %v283 = vpop.f32.mrb[0].mxu0
    %284 = vmatprep.mubr.f32.mxu0 0.0
    %285 = vmatmul.mubr.f32.gmra.mrb[0].mxu0 %v153
    %v286 = vpop.f32.mrb[0].mxu0
    %v287 = vadd.f32 %v120, %v286
    %v288 = vpop.f32.mrb[0].mxu0
    %289 = vmatprep.mubr.f32.mxu0 0.0
    %290 = vmatmul.mubr.f32.gmra.mrb[0].mxu0 %v156
    %v291 = vpop.f32.mrb[0].mxu0
    %v292 = vadd.f32 %v120, %v291
    %v293 = vpop.f32.mrb[0].mxu0
    %294 = vmatprep.mubr.f32.mxu0 0.0
    %295 = vmatmul.mubr.f32.gmra.mrb[0].mxu0 %v159
    %v296 = vpop.f32.mrb[0].mxu0
    %v297 = vadd.f32 %v120, %v296
    %v298 = vpop.f32.mrb[0].mxu0
    %299 = vmatprep.mubr.f32.mxu0 0.0
    %300 = vmatmul.mubr.f32.gmra.mrb[0].mxu0 %v162
    %v301 = vpop.f32.mrb[0].mxu0
    %v302 = vadd.f32 %v120, %v301
    %v303 = vpop.f32.mrb[0].mxu0
    %304 = vmatprep.mubr.f32.mxu0 0.0
    %305 = vmatmul.mubr.f32.gmra.mrb[0].mxu0 %v165
    %v306 = vpop.f32.mrb[0].mxu0
    %v307 = vadd.f32 %v120, %v306
    %v308 = vpop.f32.mrb[0].mxu0
    %309 = vmatprep.mubr.f32.mxu0 0.0
    %310 = vmatmul.mubr.f32.gmra.mrb[0].mxu0 %v168
    %v311 = vpop.f32.mrb[0].mxu0
    %v312 = vadd.f32 %v120, %v311
    %v313 = vpop.f32.mrb[0].mxu0
    %314 = vdwg.mxu0
    %v315 = vlaneseq
    %v316 = vshrl.u32 %v315, 7
    %v317 = vsub.s32 3, %v316
    %v318 = vrot.slane %v116, %v317
    %320 = vset.pattern.permute.xlu0 0
    %321 = vperm.xlu0 %320, %v91
    %v322 = vpop.permute.xlu0 %321
    %325 = vset.pattern.permute.xlu0 0
    %326 = vperm.xlu0 %325, %v92
    %v327 = vpop.permute.xlu0 %326
    %330 = vset.pattern.permute.xlu0 0
    %331 = vperm.xlu0 %330, %v93
    %v332 = vpop.permute.xlu0 %331
    %335 = vset.pattern.permute.xlu0 0
    %336 = vperm.xlu0 %335, %v94
    %v337 = vpop.permute.xlu0 %336
    %340 = vset.pattern.permute.xlu0 0
    %341 = vperm.xlu0 %340, %v95
    %v342 = vpop.permute.xlu0 %341
    %345 = vset.pattern.permute.xlu0 0
    %346 = vperm.xlu0 %345, %v96
    %v347 = vpop.permute.xlu0 %346
    %350 = vset.pattern.permute.xlu0 0
    %351 = vperm.xlu0 %350, %v97
    %v352 = vpop.permute.xlu0 %351
    %355 = vset.pattern.permute.xlu0 0
    %356 = vperm.xlu0 %355, %v98
    %v357 = vpop.permute.xlu0 %356
    %360 = vset.pattern.permute.xlu0 0
    %361 = vperm.xlu0 %360, %v99
    %v362 = vpop.permute.xlu0 %361
    %365 = vset.pattern.permute.xlu0 0
    %366 = vperm.xlu0 %365, %v100
    %v367 = vpop.permute.xlu0 %366
    %370 = vset.pattern.permute.xlu0 0
    %371 = vperm.xlu0 %370, %v101
    %v372 = vpop.permute.xlu0 %371
    %375 = vset.pattern.permute.xlu0 0
    %376 = vperm.xlu0 %375, %v102
    %v377 = vpop.permute.xlu0 %376
    %380 = vset.pattern.permute.xlu0 0
    %381 = vperm.xlu0 %380, %v103
    %v382 = vpop.permute.xlu0 %381
    %385 = vset.pattern.permute.xlu0 0
    %386 = vperm.xlu0 %385, %v104
    %v387 = vpop.permute.xlu0 %386
    %390 = vset.pattern.permute.xlu0 0
    %391 = vperm.xlu0 %390, %v105
    %v392 = vpop.permute.xlu0 %391
    %395 = vset.pattern.permute.xlu0 0
    %396 = vperm.xlu0 %395, %v106
    %v397 = vpop.permute.xlu0 %396
    %v399 = vmul.f32 %v318, %v322
    %v400 = vmul.f32 %v318, %v327
    %v401 = vmul.f32 %v318, %v332
    %v402 = vmul.f32 %v318, %v337
    %v403 = vmul.f32 %v318, %v342
    %v404 = vmul.f32 %v318, %v347
    %v405 = vmul.f32 %v318, %v352
    %v406 = vmul.f32 %v318, %v357
    %v407 = vmul.f32 %v318, %v362
    %v408 = vmul.f32 %v318, %v367
    %v409 = vmul.f32 %v318, %v372
    %v410 = vmul.f32 %v318, %v377
    %v411 = vmul.f32 %v318, %v382
    %v412 = vmul.f32 %v318, %v387
    %v413 = vmul.f32 %v318, %v392
    %v414 = vmul.f32 %v318, %v397
    %v415 = vadd.f32 %v237, %v399
    %v416 = vadd.f32 %v242, %v400
    %v417 = vadd.f32 %v247, %v401
    %v418 = vadd.f32 %v252, %v402
    %v419 = vadd.f32 %v257, %v403
    %v420 = vadd.f32 %v262, %v404
    %v421 = vadd.f32 %v267, %v405
    %v422 = vadd.f32 %v272, %v406
    %v423 = vadd.f32 %v277, %v407
    %v424 = vadd.f32 %v282, %v408
    %v425 = vadd.f32 %v287, %v409
    %v426 = vadd.f32 %v292, %v410
    %v427 = vadd.f32 %v297, %v411
    %v428 = vadd.f32 %v302, %v412
    %v429 = vadd.f32 %v307, %v413
    %v430 = vadd.f32 %v312, %v414
    %v431 = vtanh.pop %v415
    %v432 = vtanh.pop %v416
    %v433 = vtanh.pop %v417
    %v434 = vtanh.pop %v418
    %v435 = vtanh.pop %v419
    %v436 = vtanh.pop %v420
    %v437 = vtanh.pop %v421
    %v438 = vtanh.pop %v422
    %v439 = vtanh.pop %v423
    %v440 = vtanh.pop %v424
    %v441 = vtanh.pop %v425
    %v442 = vtanh.pop %v426
    %v443 = vtanh.pop %v427
    %v444 = vtanh.pop %v428
    %v445 = vtanh.pop %v429
    %v446 = vtanh.pop %v430
    %v447 = vtanh.pop %v237
    %v448 = vtanh.pop %v242
    %v449 = vtanh.pop %v247
    %v450 = vtanh.pop %v252
    %v451 = vtanh.pop %v257
    %v452 = vtanh.pop %v262
    %v453 = vtanh.pop %v267
    %v454 = vtanh.pop %v272
    %v455 = vtanh.pop %v277
    %v456 = vtanh.pop %v282
    %v457 = vtanh.pop %v287
    %v458 = vtanh.pop %v292
    %v459 = vtanh.pop %v297
    %v460 = vtanh.pop %v302
    %v461 = vtanh.pop %v307
    %v462 = vtanh.pop %v312
    %v463 = vmul.f32 %v431, %v431
    %v464 = vmul.f32 %v432, %v432
    %v465 = vmul.f32 %v433, %v433
    %v466 = vmul.f32 %v434, %v434
    %v467 = vmul.f32 %v435, %v435
    %v468 = vmul.f32 %v436, %v436
    %v469 = vmul.f32 %v437, %v437
    %v470 = vmul.f32 %v438, %v438
    %v471 = vmul.f32 %v439, %v439
    %v472 = vmul.f32 %v440, %v440
    %v473 = vmul.f32 %v441, %v441
    %v474 = vmul.f32 %v442, %v442
    %v475 = vmul.f32 %v443, %v443
    %v476 = vmul.f32 %v444, %v444
    %v477 = vmul.f32 %v445, %v445
    %v478 = vmul.f32 %v446, %v446
    %v479 = vsub.f32 1.0, %v463
    %v480 = vsub.f32 1.0, %v464
    %v481 = vsub.f32 1.0, %v465
    %v482 = vsub.f32 1.0, %v466
    %v483 = vsub.f32 1.0, %v467
    %v484 = vsub.f32 1.0, %v468
    %v485 = vsub.f32 1.0, %v469
    %v486 = vsub.f32 1.0, %v470
    %v487 = vsub.f32 1.0, %v471
    %v488 = vsub.f32 1.0, %v472
    %v489 = vsub.f32 1.0, %v473
    %v490 = vsub.f32 1.0, %v474
    %v491 = vsub.f32 1.0, %v475
    %v492 = vsub.f32 1.0, %v476
    %v493 = vsub.f32 1.0, %v477
    %v494 = vsub.f32 1.0, %v478
    %v495 = vmul.f32 %v479, %v318
    %v496 = vmul.f32 %v480, %v318
    %v497 = vmul.f32 %v481, %v318
    %v498 = vmul.f32 %v482, %v318
    %v499 = vmul.f32 %v483, %v318
    %v500 = vmul.f32 %v484, %v318
    %v501 = vmul.f32 %v485, %v318
    %v502 = vmul.f32 %v486, %v318
    %v503 = vmul.f32 %v487, %v318
    %v504 = vmul.f32 %v488, %v318
    %v505 = vmul.f32 %v489, %v318
    %v506 = vmul.f32 %v490, %v318
    %v507 = vmul.f32 %v491, %v318
    %v508 = vmul.f32 %v492, %v318
    %v509 = vmul.f32 %v493, %v318
    %v510 = vmul.f32 %v494, %v318
    %v512 = vsel %vm121, %v495, 0
    %v515 = vsel %vm121, %v496, 0
    %v518 = vsel %vm121, %v497, 0
    %v521 = vsel %vm121, %v498, 0
    %v524 = vsel %vm121, %v499, 0
    %v527 = vsel %vm121, %v500, 0
    %v530 = vsel %vm121, %v501, 0
    %v533 = vsel %vm121, %v502, 0
    %v536 = vsel %vm121, %v503, 0
    %v539 = vsel %vm121, %v504, 0
    %v542 = vsel %vm121, %v505, 0
    %v545 = vsel %vm121, %v506, 0
    %v548 = vsel %vm121, %v507, 0
    %v551 = vsel %vm121, %v508, 0
    %v554 = vsel %vm121, %v509, 0
    %v557 = vsel %vm121, %v510, 0
    %559 = vmatprep.subr.mxu0 0.0
    %560 = vmatpush1.msra.mxu0 %v112
    %561 = vmatprep.subr.mxu0 0.0
    %562 = vmatpush1.msra.mxu0 %v113
    %563 = vmatprep.subr.mxu0 0.0
    %564 = vmatpush1.msra.mxu0 %v114
    %565 = vmatprep.subr.mxu0 0.0
    %566 = vmatpush1.msra.mxu0 %v115
    %567 = vmatprep.subr.mxu0 0.0
    %568 = vmatpush1.msra.mxu0 0.0
    %569 = vmatprep.subr.mxu0 0.0
    %570 = vmatpush1.msra.mxu0 0.0
    %571 = vmatprep.subr.mxu0 0.0
    %572 = vmatpush1.msra.mxu0 0.0
    %573 = vmatprep.subr.mxu0 0.0
    %574 = vmatpush1.msra.mxu0 0.0
    %575 = vmatprep.subr.mxu0 0.0
    %576 = vmatpush1.msra.mxu0 0.0
    %577 = vmatprep.subr.mxu0 0.0
    %578 = vmatpush1.msra.mxu0 0.0
    %579 = vmatprep.subr.mxu0 0.0
    %580 = vmatpush1.msra.mxu0 0.0
    %581 = vmatprep.subr.mxu0 0.0
    %582 = vmatpush1.msra.mxu0 0.0
    %583 = vmatprep.subr.mxu0 0.0
    %584 = vmatpush1.msra.mxu0 0.0
    %585 = vmatprep.subr.mxu0 0.0
    %586 = vmatpush1.msra.mxu0 0.0
    %587 = vmatprep.subr.mxu0 0.0
    %588 = vmatpush1.msra.mxu0 0.0
    %589 = vmatprep.subr.mxu0 0.0
    %590 = vmatpush1.msra.mxu0 0.0
    %591 = vmatprep.subr.mxu0 0.0
    %592 = vmatpush1.msra.mxu0 0.0
    %593 = vmatprep.subr.mxu0 0.0
    %594 = vmatpush1.msra.mxu0 0.0
    %595 = vmatprep.subr.mxu0 0.0
    %596 = vmatpush1.msra.mxu0 0.0
    %597 = vmatprep.subr.mxu0 0.0
    %598 = vmatpush1.msra.mxu0 0.0
    %599 = vmatprep.subr.mxu0 0.0
    %600 = vmatpush1.msra.mxu0 0.0
    %601 = vmatprep.subr.mxu0 0.0
    %602 = vmatpush1.msra.mxu0 0.0
    %603 = vmatprep.subr.mxu0 0.0
    %604 = vmatpush1.msra.mxu0 0.0
    %605 = vmatprep.subr.mxu0 0.0
    %606 = vmatpush1.msra.mxu0 0.0
    %607 = vmatprep.subr.mxu0 0.0
    %608 = vmatpush1.msra.mxu0 0.0
    %609 = vmatprep.subr.mxu0 0.0
    %610 = vmatpush1.msra.mxu0 0.0
    %611 = vmatprep.subr.mxu0 0.0
    %612 = vmatpush1.msra.mxu0 0.0
    %613 = vmatprep.subr.mxu0 0.0
    %614 = vmatpush1.msra.mxu0 0.0
    %615 = vmatprep.subr.mxu0 0.0
    %616 = vmatpush1.msra.mxu0 0.0
    %617 = vmatprep.subr.mxu0 0.0
    %618 = vmatpush1.msra.mxu0 0.0
    %619 = vmatprep.subr.mxu0 0.0
    %620 = vmatpush1.msra.mxu0 0.0
    %621 = vmatprep.subr.mxu0 0.0
    %622 = vmatpush1.msra.mxu0 0.0
    %623 = vmatprep.mubr.f32.mxu0 0.0
    %624 = vmatmul.mubr.f32.gmra.mrb[0].mxu0 %v512
    %v625 = vpop.f32.mrb[0].mxu0
    %v626 = vadd.f32 0.0, %v625
    %v627 = vpop.f32.mrb[0].mxu0
    %628 = vmatprep.mubr.f32.mxu0 0.0
    %629 = vmatmul.mubr.f32.gmra.mrb[0].mxu0 %v515
    %v630 = vpop.f32.mrb[0].mxu0
    %v631 = vadd.f32 0.0, %v630
    %v632 = vpop.f32.mrb[0].mxu0
    %633 = vmatprep.mubr.f32.mxu0 0.0
    %634 = vmatmul.mubr.f32.gmra.mrb[0].mxu0 %v518
    %v635 = vpop.f32.mrb[0].mxu0
    %v636 = vadd.f32 0.0, %v635
    %v637 = vpop.f32.mrb[0].mxu0
    %638 = vmatprep.mubr.f32.mxu0 0.0
    %639 = vmatmul.mubr.f32.gmra.mrb[0].mxu0 %v521
    %v640 = vpop.f32.mrb[0].mxu0
    %v641 = vadd.f32 0.0, %v640
    %v642 = vpop.f32.mrb[0].mxu0
    %643 = vmatprep.mubr.f32.mxu0 0.0
    %644 = vmatmul.mubr.f32.gmra.mrb[0].mxu0 %v524
    %v645 = vpop.f32.mrb[0].mxu0
    %v646 = vadd.f32 0.0, %v645
    %v647 = vpop.f32.mrb[0].mxu0
    %648 = vmatprep.mubr.f32.mxu0 0.0
    %649 = vmatmul.mubr.f32.gmra.mrb[0].mxu0 %v527
    %v650 = vpop.f32.mrb[0].mxu0
    %v651 = vadd.f32 0.0, %v650
    %v652 = vpop.f32.mrb[0].mxu0
    %653 = vmatprep.mubr.f32.mxu0 0.0
    %654 = vmatmul.mubr.f32.gmra.mrb[0].mxu0 %v530
    %v655 = vpop.f32.mrb[0].mxu0
    %v656 = vadd.f32 0.0, %v655
    %v657 = vpop.f32.mrb[0].mxu0
    %658 = vmatprep.mubr.f32.mxu0 0.0
    %659 = vmatmul.mubr.f32.gmra.mrb[0].mxu0 %v533
    %v660 = vpop.f32.mrb[0].mxu0
    %v661 = vadd.f32 0.0, %v660
    %v662 = vpop.f32.mrb[0].mxu0
    %663 = vmatprep.mubr.f32.mxu0 0.0
    %664 = vmatmul.mubr.f32.gmra.mrb[0].mxu0 %v536
    %v665 = vpop.f32.mrb[0].mxu0
    %v666 = vadd.f32 0.0, %v665
    %v667 = vpop.f32.mrb[0].mxu0
    %668 = vmatprep.mubr.f32.mxu0 0.0
    %669 = vmatmul.mubr.f32.gmra.mrb[0].mxu0 %v539
    %v670 = vpop.f32.mrb[0].mxu0
    %v671 = vadd.f32 0.0, %v670
    %v672 = vpop.f32.mrb[0].mxu0
    %673 = vmatprep.mubr.f32.mxu0 0.0
    %674 = vmatmul.mubr.f32.gmra.mrb[0].mxu0 %v542
    %v675 = vpop.f32.mrb[0].mxu0
    %v676 = vadd.f32 0.0, %v675
    %v677 = vpop.f32.mrb[0].mxu0
    %678 = vmatprep.mubr.f32.mxu0 0.0
    %679 = vmatmul.mubr.f32.gmra.mrb[0].mxu0 %v545
    %v680 = vpop.f32.mrb[0].mxu0
    %v681 = vadd.f32 0.0, %v680
    %v682 = vpop.f32.mrb[0].mxu0
    %683 = vmatprep.mubr.f32.mxu0 0.0
    %684 = vmatmul.mubr.f32.gmra.mrb[0].mxu0 %v548
    %v685 = vpop.f32.mrb[0].mxu0
    %v686 = vadd.f32 0.0, %v685
    %v687 = vpop.f32.mrb[0].mxu0
    %688 = vmatprep.mubr.f32.mxu0 0.0
    %689 = vmatmul.mubr.f32.gmra.mrb[0].mxu0 %v551
    %v690 = vpop.f32.mrb[0].mxu0
    %v691 = vadd.f32 0.0, %v690
    %v692 = vpop.f32.mrb[0].mxu0
    %693 = vmatprep.mubr.f32.mxu0 0.0
    %694 = vmatmul.mubr.f32.gmra.mrb[0].mxu0 %v554
    %v695 = vpop.f32.mrb[0].mxu0
    %v696 = vadd.f32 0.0, %v695
    %v697 = vpop.f32.mrb[0].mxu0
    %698 = vmatprep.mubr.f32.mxu0 0.0
    %699 = vmatmul.mubr.f32.gmra.mrb[0].mxu0 %v557
    %v700 = vpop.f32.mrb[0].mxu0
    %v701 = vadd.f32 0.0, %v700
    %v702 = vpop.f32.mrb[0].mxu0
    %703 = vdwg.mxu0
    %v704 = vlaneseq
    %v705 = vshrl.u32 %v704, 7
    %v706 = vsub.s32 4, %v705
    %v707 = vrot.slane %v116, %v706
    %v709 = vsel %vm121, %v431, 0
    %v712 = vsel %vm121, %v432, 0
    %v715 = vsel %vm121, %v433, 0
    %v718 = vsel %vm121, %v434, 0
    %v721 = vsel %vm121, %v435, 0
    %v724 = vsel %vm121, %v436, 0
    %v727 = vsel %vm121, %v437, 0
    %v730 = vsel %vm121, %v438, 0
    %v733 = vsel %vm121, %v439, 0
    %v736 = vsel %vm121, %v440, 0
    %v739 = vsel %vm121, %v441, 0
    %v742 = vsel %vm121, %v442, 0
    %v745 = vsel %vm121, %v443, 0
    %v748 = vsel %vm121, %v444, 0
    %v751 = vsel %vm121, %v445, 0
    %v754 = vsel %vm121, %v446, 0
    %756 = vmatprep.subr.mxu0 0.0
    %757 = vmatpush1.msra.mxu0 %v112
    %758 = vmatprep.subr.mxu0 0.0
    %759 = vmatpush1.msra.mxu0 %v113
    %760 = vmatprep.subr.mxu0 0.0
    %761 = vmatpush1.msra.mxu0 %v114
    %762 = vmatprep.subr.mxu0 0.0
    %763 = vmatpush1.msra.mxu0 %v115
    %764 = vmatprep.subr.mxu0 0.0
    %765 = vmatpush1.msra.mxu0 0.0
    %766 = vmatprep.subr.mxu0 0.0
    %767 = vmatpush1.msra.mxu0 0.0
    %768 = vmatprep.subr.mxu0 0.0
    %769 = vmatpush1.msra.mxu0 0.0
    %770 = vmatprep.subr.mxu0 0.0
    %771 = vmatpush1.msra.mxu0 0.0
    %772 = vmatprep.subr.mxu0 0.0
    %773 = vmatpush1.msra.mxu0 0.0
    %774 = vmatprep.subr.mxu0 0.0
    %775 = vmatpush1.msra.mxu0 0.0
    %776 = vmatprep.subr.mxu0 0.0
    %777 = vmatpush1.msra.mxu0 0.0
    %778 = vmatprep.subr.mxu0 0.0
    %779 = vmatpush1.msra.mxu0 0.0
    %780 = vmatprep.subr.mxu0 0.0
    %781 = vmatpush1.msra.mxu0 0.0
    %782 = vmatprep.subr.mxu0 0.0
    %783 = vmatpush1.msra.mxu0 0.0
    %784 = vmatprep.subr.mxu0 0.0
    %785 = vmatpush1.msra.mxu0 0.0
    %786 = vmatprep.subr.mxu0 0.0
    %787 = vmatpush1.msra.mxu0 0.0
    %788 = vmatprep.subr.mxu0 0.0
    %789 = vmatpush1.msra.mxu0 0.0
    %790 = vmatprep.subr.mxu0 0.0
    %791 = vmatpush1.msra.mxu0 0.0
    %792 = vmatprep.subr.mxu0 0.0
    %793 = vmatpush1.msra.mxu0 0.0
    %794 = vmatprep.subr.mxu0 0.0
    %795 = vmatpush1.msra.mxu0 0.0
    %796 = vmatprep.subr.mxu0 0.0
    %797 = vmatpush1.msra.mxu0 0.0
    %798 = vmatprep.subr.mxu0 0.0
    %799 = vmatpush1.msra.mxu0 0.0
    %800 = vmatprep.subr.mxu0 0.0
    %801 = vmatpush1.msra.mxu0 0.0
    %802 = vmatprep.subr.mxu0 0.0
    %803 = vmatpush1.msra.mxu0 0.0
    %804 = vmatprep.subr.mxu0 0.0
    %805 = vmatpush1.msra.mxu0 0.0
    %806 = vmatprep.subr.mxu0 0.0
    %807 = vmatpush1.msra.mxu0 0.0
    %808 = vmatprep.subr.mxu0 0.0
    %809 = vmatpush1.msra.mxu0 0.0
    %810 = vmatprep.subr.mxu0 0.0
    %811 = vmatpush1.msra.mxu0 0.0
    %812 = vmatprep.subr.mxu0 0.0
    %813 = vmatpush1.msra.mxu0 0.0
    %814 = vmatprep.subr.mxu0 0.0
    %815 = vmatpush1.msra.mxu0 0.0
    %816 = vmatprep.subr.mxu0 0.0
    %817 = vmatpush1.msra.mxu0 0.0
    %818 = vmatprep.subr.mxu0 0.0
    %819 = vmatpush1.msra.mxu0 0.0
    %820 = vmatprep.mubr.f32.mxu0 0.0
    %821 = vmatmul.mubr.f32.gmra.mrb[0].mxu0 %v709
    %v822 = vpop.f32.mrb[0].mxu0
    %v823 = vadd.f32 %v707, %v822
    %v824 = vpop.f32.mrb[0].mxu0
    %825 = vmatprep.mubr.f32.mxu0 0.0
    %826 = vmatmul.mubr.f32.gmra.mrb[0].mxu0 %v712
    %v827 = vpop.f32.mrb[0].mxu0
    %v828 = vadd.f32 %v707, %v827
    %v829 = vpop.f32.mrb[0].mxu0
    %830 = vmatprep.mubr.f32.mxu0 0.0
    %831 = vmatmul.mubr.f32.gmra.mrb[0].mxu0 %v715
    %v832 = vpop.f32.mrb[0].mxu0
    %v833 = vadd.f32 %v707, %v832
    %v834 = vpop.f32.mrb[0].mxu0
    %835 = vmatprep.mubr.f32.mxu0 0.0
    %836 = vmatmul.mubr.f32.gmra.mrb[0].mxu0 %v718
    %v837 = vpop.f32.mrb[0].mxu0
    %v838 = vadd.f32 %v707, %v837
    %v839 = vpop.f32.mrb[0].mxu0
    %840 = vmatprep.mubr.f32.mxu0 0.0
    %841 = vmatmul.mubr.f32.gmra.mrb[0].mxu0 %v721
    %v842 = vpop.f32.mrb[0].mxu0
    %v843 = vadd.f32 %v707, %v842
    %v844 = vpop.f32.mrb[0].mxu0
    %845 = vmatprep.mubr.f32.mxu0 0.0
    %846 = vmatmul.mubr.f32.gmra.mrb[0].mxu0 %v724
    %v847 = vpop.f32.mrb[0].mxu0
    %v848 = vadd.f32 %v707, %v847
    %v849 = vpop.f32.mrb[0].mxu0
    %850 = vmatprep.mubr.f32.mxu0 0.0
    %851 = vmatmul.mubr.f32.gmra.mrb[0].mxu0 %v727
    %v852 = vpop.f32.mrb[0].mxu0
    %v853 = vadd.f32 %v707, %v852
    %v854 = vpop.f32.mrb[0].mxu0
    %855 = vmatprep.mubr.f32.mxu0 0.0
    %856 = vmatmul.mubr.f32.gmra.mrb[0].mxu0 %v730
    %v857 = vpop.f32.mrb[0].mxu0
    %v858 = vadd.f32 %v707, %v857
    %v859 = vpop.f32.mrb[0].mxu0
    %860 = vmatprep.mubr.f32.mxu0 0.0
    %861 = vmatmul.mubr.f32.gmra.mrb[0].mxu0 %v733
    %v862 = vpop.f32.mrb[0].mxu0
    %v863 = vadd.f32 %v707, %v862
    %v864 = vpop.f32.mrb[0].mxu0
    %865 = vmatprep.mubr.f32.mxu0 0.0
    %866 = vmatmul.mubr.f32.gmra.mrb[0].mxu0 %v736
    %v867 = vpop.f32.mrb[0].mxu0
    %v868 = vadd.f32 %v707, %v867
    %v869 = vpop.f32.mrb[0].mxu0
    %870 = vmatprep.mubr.f32.mxu0 0.0
    %871 = vmatmul.mubr.f32.gmra.mrb[0].mxu0 %v739
    %v872 = vpop.f32.mrb[0].mxu0
    %v873 = vadd.f32 %v707, %v872
    %v874 = vpop.f32.mrb[0].mxu0
    %875 = vmatprep.mubr.f32.mxu0 0.0
    %876 = vmatmul.mubr.f32.gmra.mrb[0].mxu0 %v742
    %v877 = vpop.f32.mrb[0].mxu0
    %v878 = vadd.f32 %v707, %v877
    %v879 = vpop.f32.mrb[0].mxu0
    %880 = vmatprep.mubr.f32.mxu0 0.0
    %881 = vmatmul.mubr.f32.gmra.mrb[0].mxu0 %v745
    %v882 = vpop.f32.mrb[0].mxu0
    %v883 = vadd.f32 %v707, %v882
    %v884 = vpop.f32.mrb[0].mxu0
    %885 = vmatprep.mubr.f32.mxu0 0.0
    %886 = vmatmul.mubr.f32.gmra.mrb[0].mxu0 %v748
    %v887 = vpop.f32.mrb[0].mxu0
    %v888 = vadd.f32 %v707, %v887
    %v889 = vpop.f32.mrb[0].mxu0
    %890 = vmatprep.mubr.f32.mxu0 0.0
    %891 = vmatmul.mubr.f32.gmra.mrb[0].mxu0 %v751
    %v892 = vpop.f32.mrb[0].mxu0
    %v893 = vadd.f32 %v707, %v892
    %v894 = vpop.f32.mrb[0].mxu0
    %895 = vmatprep.mubr.f32.mxu0 0.0
    %896 = vmatmul.mubr.f32.gmra.mrb[0].mxu0 %v754
    %v897 = vpop.f32.mrb[0].mxu0
    %v898 = vadd.f32 %v707, %v897
    %v899 = vpop.f32.mrb[0].mxu0
    %900 = vdwg.mxu0
    %v901 = vtanh.pop %v823
    %v902 = vtanh.pop %v828
    %v903 = vtanh.pop %v833
    %v904 = vtanh.pop %v838
    %v905 = vtanh.pop %v843
    %v906 = vtanh.pop %v848
    %v907 = vtanh.pop %v853
    %v908 = vtanh.pop %v858
    %v909 = vtanh.pop %v863
    %v910 = vtanh.pop %v868
    %v911 = vtanh.pop %v873
    %v912 = vtanh.pop %v878
    %v913 = vtanh.pop %v883
    %v914 = vtanh.pop %v888
    %v915 = vtanh.pop %v893
    %v916 = vtanh.pop %v898
    %v918 = vsel %vm121, %v447, 0
    %v921 = vsel %vm121, %v448, 0
    %v924 = vsel %vm121, %v449, 0
    %v927 = vsel %vm121, %v450, 0
    %v930 = vsel %vm121, %v451, 0
    %v933 = vsel %vm121, %v452, 0
    %v936 = vsel %vm121, %v453, 0
    %v939 = vsel %vm121, %v454, 0
    %v942 = vsel %vm121, %v455, 0
    %v945 = vsel %vm121, %v456, 0
    %v948 = vsel %vm121, %v457, 0
    %v951 = vsel %vm121, %v458, 0
    %v954 = vsel %vm121, %v459, 0
    %v957 = vsel %vm121, %v460, 0
    %v960 = vsel %vm121, %v461, 0
    %v963 = vsel %vm121, %v462, 0
    %965 = vmatprep.subr.mxu0 0.0
    %966 = vmatpush1.msra.mxu0 %v112
    %967 = vmatprep.subr.mxu0 0.0
    %968 = vmatpush1.msra.mxu0 %v113
    %969 = vmatprep.subr.mxu0 0.0
    %970 = vmatpush1.msra.mxu0 %v114
    %971 = vmatprep.subr.mxu0 0.0
    %972 = vmatpush1.msra.mxu0 %v115
    %973 = vmatprep.subr.mxu0 0.0
    %974 = vmatpush1.msra.mxu0 0.0
    %975 = vmatprep.subr.mxu0 0.0
    %976 = vmatpush1.msra.mxu0 0.0
    %977 = vmatprep.subr.mxu0 0.0
    %978 = vmatpush1.msra.mxu0 0.0
    %979 = vmatprep.subr.mxu0 0.0
    %980 = vmatpush1.msra.mxu0 0.0
    %981 = vmatprep.subr.mxu0 0.0
    %982 = vmatpush1.msra.mxu0 0.0
    %983 = vmatprep.subr.mxu0 0.0
    %984 = vmatpush1.msra.mxu0 0.0
    %985 = vmatprep.subr.mxu0 0.0
    %986 = vmatpush1.msra.mxu0 0.0
    %987 = vmatprep.subr.mxu0 0.0
    %988 = vmatpush1.msra.mxu0 0.0
    %989 = vmatprep.subr.mxu0 0.0
    %990 = vmatpush1.msra.mxu0 0.0
    %991 = vmatprep.subr.mxu0 0.0
    %992 = vmatpush1.msra.mxu0 0.0
    %993 = vmatprep.subr.mxu0 0.0
    %994 = vmatpush1.msra.mxu0 0.0
    %995 = vmatprep.subr.mxu0 0.0
    %996 = vmatpush1.msra.mxu0 0.0
    %997 = vmatprep.subr.mxu0 0.0
    %998 = vmatpush1.msra.mxu0 0.0
    %999 = vmatprep.subr.mxu0 0.0
    %1000 = vmatpush1.msra.mxu0 0.0
    %1001 = vmatprep.subr.mxu0 0.0
    %1002 = vmatpush1.msra.mxu0 0.0
    %1003 = vmatprep.subr.mxu0 0.0
    %1004 = vmatpush1.msra.mxu0 0.0
    %1005 = vmatprep.subr.mxu0 0.0
    %1006 = vmatpush1.msra.mxu0 0.0
    %1007 = vmatprep.subr.mxu0 0.0
    %1008 = vmatpush1.msra.mxu0 0.0
    %1009 = vmatprep.subr.mxu0 0.0
    %1010 = vmatpush1.msra.mxu0 0.0
    %1011 = vmatprep.subr.mxu0 0.0
    %1012 = vmatpush1.msra.mxu0 0.0
    %1013 = vmatprep.subr.mxu0 0.0
    %1014 = vmatpush1.msra.mxu0 0.0
    %1015 = vmatprep.subr.mxu0 0.0
    %1016 = vmatpush1.msra.mxu0 0.0
    %1017 = vmatprep.subr.mxu0 0.0
    %1018 = vmatpush1.msra.mxu0 0.0
    %1019 = vmatprep.subr.mxu0 0.0
    %1020 = vmatpush1.msra.mxu0 0.0
    %1021 = vmatprep.subr.mxu0 0.0
    %1022 = vmatpush1.msra.mxu0 0.0
    %1023 = vmatprep.subr.mxu0 0.0
    %1024 = vmatpush1.msra.mxu0 0.0
    %1025 = vmatprep.subr.mxu0 0.0
    %1026 = vmatpush1.msra.mxu0 0.0
    %1027 = vmatprep.subr.mxu0 0.0
    %1028 = vmatpush1.msra.mxu0 0.0
    %1029 = vmatprep.mubr.f32.mxu0 0.0
    %1030 = vmatmul.mubr.f32.gmra.mrb[0].mxu0 %v918
    %v1031 = vpop.f32.mrb[0].mxu0
    %v1032 = vadd.f32 %v707, %v1031
    %v1033 = vpop.f32.mrb[0].mxu0
    %1034 = vmatprep.mubr.f32.mxu0 0.0
    %1035 = vmatmul.mubr.f32.gmra.mrb[0].mxu0 %v921
    %v1036 = vpop.f32.mrb[0].mxu0
    %v1037 = vadd.f32 %v707, %v1036
    %v1038 = vpop.f32.mrb[0].mxu0
    %1039 = vmatprep.mubr.f32.mxu0 0.0
    %1040 = vmatmul.mubr.f32.gmra.mrb[0].mxu0 %v924
    %v1041 = vpop.f32.mrb[0].mxu0
    %v1042 = vadd.f32 %v707, %v1041
    %v1043 = vpop.f32.mrb[0].mxu0
    %1044 = vmatprep.mubr.f32.mxu0 0.0
    %1045 = vmatmul.mubr.f32.gmra.mrb[0].mxu0 %v927
    %v1046 = vpop.f32.mrb[0].mxu0
    %v1047 = vadd.f32 %v707, %v1046
    %v1048 = vpop.f32.mrb[0].mxu0
    %1049 = vmatprep.mubr.f32.mxu0 0.0
    %1050 = vmatmul.mubr.f32.gmra.mrb[0].mxu0 %v930
    %v1051 = vpop.f32.mrb[0].mxu0
    %v1052 = vadd.f32 %v707, %v1051
    %v1053 = vpop.f32.mrb[0].mxu0
    %1054 = vmatprep.mubr.f32.mxu0 0.0
    %1055 = vmatmul.mubr.f32.gmra.mrb[0].mxu0 %v933
    %v1056 = vpop.f32.mrb[0].mxu0
    %v1057 = vadd.f32 %v707, %v1056
    %v1058 = vpop.f32.mrb[0].mxu0
    %1059 = vmatprep.mubr.f32.mxu0 0.0
    %1060 = vmatmul.mubr.f32.gmra.mrb[0].mxu0 %v936
    %v1061 = vpop.f32.mrb[0].mxu0
    %v1062 = vadd.f32 %v707, %v1061
    %v1063 = vpop.f32.mrb[0].mxu0
    %1064 = vmatprep.mubr.f32.mxu0 0.0
    %1065 = vmatmul.mubr.f32.gmra.mrb[0].mxu0 %v939
    %v1066 = vpop.f32.mrb[0].mxu0
    %v1067 = vadd.f32 %v707, %v1066
    %v1068 = vpop.f32.mrb[0].mxu0
    %1069 = vmatprep.mubr.f32.mxu0 0.0
    %1070 = vmatmul.mubr.f32.gmra.mrb[0].mxu0 %v942
    %v1071 = vpop.f32.mrb[0].mxu0
    %v1072 = vadd.f32 %v707, %v1071
    %v1073 = vpop.f32.mrb[0].mxu0
    %1074 = vmatprep.mubr.f32.mxu0 0.0
    %1075 = vmatmul.mubr.f32.gmra.mrb[0].mxu0 %v945
    %v1076 = vpop.f32.mrb[0].mxu0
    %v1077 = vadd.f32 %v707, %v1076
    %v1078 = vpop.f32.mrb[0].mxu0
    %1079 = vmatprep.mubr.f32.mxu0 0.0
    %1080 = vmatmul.mubr.f32.gmra.mrb[0].mxu0 %v948
    %v1081 = vpop.f32.mrb[0].mxu0
    %v1082 = vadd.f32 %v707, %v1081
    %v1083 = vpop.f32.mrb[0].mxu0
    %1084 = vmatprep.mubr.f32.mxu0 0.0
    %1085 = vmatmul.mubr.f32.gmra.mrb[0].mxu0 %v951
    %v1086 = vpop.f32.mrb[0].mxu0
    %v1087 = vadd.f32 %v707, %v1086
    %v1088 = vpop.f32.mrb[0].mxu0
    %1089 = vmatprep.mubr.f32.mxu0 0.0
    %1090 = vmatmul.mubr.f32.gmra.mrb[0].mxu0 %v954
    %v1091 = vpop.f32.mrb[0].mxu0
    %v1092 = vadd.f32 %v707, %v1091
    %v1093 = vpop.f32.mrb[0].mxu0
    %1094 = vmatprep.mubr.f32.mxu0 0.0
    %1095 = vmatmul.mubr.f32.gmra.mrb[0].mxu0 %v957
    %v1096 = vpop.f32.mrb[0].mxu0
    %v1097 = vadd.f32 %v707, %v1096
    %v1098 = vpop.f32.mrb[0].mxu0
    %1099 = vmatprep.mubr.f32.mxu0 0.0
    %1100 = vmatmul.mubr.f32.gmra.mrb[0].mxu0 %v960
    %v1101 = vpop.f32.mrb[0].mxu0
    %v1102 = vadd.f32 %v707, %v1101
    %v1103 = vpop.f32.mrb[0].mxu0
    %1104 = vmatprep.mubr.f32.mxu0 0.0
    %1105 = vmatmul.mubr.f32.gmra.mrb[0].mxu0 %v963
    %v1106 = vpop.f32.mrb[0].mxu0
    %v1107 = vadd.f32 %v707, %v1106
    %v1108 = vpop.f32.mrb[0].mxu0
    %1109 = vdwg.mxu0
    %v1110 = vtanh.pop %v1032
    %v1111 = vtanh.pop %v1037
    %v1112 = vtanh.pop %v1042
    %v1113 = vtanh.pop %v1047
    %v1114 = vtanh.pop %v1052
    %v1115 = vtanh.pop %v1057
    %v1116 = vtanh.pop %v1062
    %v1117 = vtanh.pop %v1067
    %v1118 = vtanh.pop %v1072
    %v1119 = vtanh.pop %v1077
    %v1120 = vtanh.pop %v1082
    %v1121 = vtanh.pop %v1087
    %v1122 = vtanh.pop %v1092
    %v1123 = vtanh.pop %v1097
    %v1124 = vtanh.pop %v1102
    %v1125 = vtanh.pop %v1107
    %v1126 = vmul.f32 %v901, %v901
    %v1127 = vmul.f32 %v902, %v902
    %v1128 = vmul.f32 %v903, %v903
    %v1129 = vmul.f32 %v904, %v904
    %v1130 = vmul.f32 %v905, %v905
    %v1131 = vmul.f32 %v906, %v906
    %v1132 = vmul.f32 %v907, %v907
    %v1133 = vmul.f32 %v908, %v908
    %v1134 = vmul.f32 %v909, %v909
    %v1135 = vmul.f32 %v910, %v910
    %v1136 = vmul.f32 %v911, %v911
    %v1137 = vmul.f32 %v912, %v912
    %v1138 = vmul.f32 %v913, %v913
    %v1139 = vmul.f32 %v914, %v914
    %v1140 = vmul.f32 %v915, %v915
    %v1141 = vmul.f32 %v916, %v916
    %v1142 = vsub.f32 1.0, %v1126
    %v1143 = vsub.f32 1.0, %v1127
    %v1144 = vsub.f32 1.0, %v1128
    %v1145 = vsub.f32 1.0, %v1129
    %v1146 = vsub.f32 1.0, %v1130
    %v1147 = vsub.f32 1.0, %v1131
    %v1148 = vsub.f32 1.0, %v1132
    %v1149 = vsub.f32 1.0, %v1133
    %v1150 = vsub.f32 1.0, %v1134
    %v1151 = vsub.f32 1.0, %v1135
    %v1152 = vsub.f32 1.0, %v1136
    %v1153 = vsub.f32 1.0, %v1137
    %v1154 = vsub.f32 1.0, %v1138
    %v1155 = vsub.f32 1.0, %v1139
    %v1156 = vsub.f32 1.0, %v1140
    %v1157 = vsub.f32 1.0, %v1141
    %v1158 = vmul.f32 %v1142, %v626
    %v1159 = vmul.f32 %v1143, %v631
    %v1160 = vmul.f32 %v1144, %v636
    %v1161 = vmul.f32 %v1145, %v641
    %v1162 = vmul.f32 %v1146, %v646
    %v1163 = vmul.f32 %v1147, %v651
    %v1164 = vmul.f32 %v1148, %v656
    %v1165 = vmul.f32 %v1149, %v661
    %v1166 = vmul.f32 %v1150, %v666
    %v1167 = vmul.f32 %v1151, %v671
    %v1168 = vmul.f32 %v1152, %v676
    %v1169 = vmul.f32 %v1153, %v681
    %v1170 = vmul.f32 %v1154, %v686
    %v1171 = vmul.f32 %v1155, %v691
    %v1172 = vmul.f32 %v1156, %v696
    %v1173 = vmul.f32 %v1157, %v701
    %v1174 = vsub.f32 %v901, %v1110
    %v1175 = vsub.f32 %v902, %v1111
    %v1176 = vsub.f32 %v903, %v1112
    %v1177 = vsub.f32 %v904, %v1113
    %v1178 = vsub.f32 %v905, %v1114
    %v1179 = vsub.f32 %v906, %v1115
    %v1180 = vsub.f32 %v907, %v1116
    %v1181 = vsub.f32 %v908, %v1117
    %v1182 = vsub.f32 %v909, %v1118
    %v1183 = vsub.f32 %v910, %v1119
    %v1184 = vsub.f32 %v911, %v1120
    %v1185 = vsub.f32 %v912, %v1121
    %v1186 = vsub.f32 %v913, %v1122
    %v1187 = vsub.f32 %v914, %v1123
    %v1188 = vsub.f32 %v915, %v1124
    %v1189 = vsub.f32 %v916, %v1125
    %v1191 = vsel %vm121, %v116, 0
    %v1194 = vsel %vm121, %v1174, 0
    %v1197 = vsel %vm121, %v1175, 0
    %v1200 = vsel %vm121, %v1176, 0
    %v1203 = vsel %vm121, %v1177, 0
    %v1206 = vsel %vm121, %v1178, 0
    %v1209 = vsel %vm121, %v1179, 0
    %v1212 = vsel %vm121, %v1180, 0
    %v1215 = vsel %vm121, %v1181, 0
    %v1218 = vsel %vm121, %v1182, 0
    %v1221 = vsel %vm121, %v1183, 0
    %v1224 = vsel %vm121, %v1184, 0
    %v1227 = vsel %vm121, %v1185, 0
    %v1230 = vsel %vm121, %v1186, 0
    %v1233 = vsel %vm121, %v1187, 0
    %v1236 = vsel %vm121, %v1188, 0
    %v1239 = vsel %vm121, %v1189, 0
    %1241 = vmatprep.subr.mxu0 0.0
    %1242 = vmatpush1.xpose.msra.mxu0 %v1194
    %1243 = vmatprep.subr.mxu0 0.0
    %1244 = vmatpush1.xpose.msra.mxu0 %v1197
    %1245 = vmatprep.subr.mxu0 0.0
    %1246 = vmatpush1.xpose.msra.mxu0 %v1200
    %1247 = vmatprep.subr.mxu0 0.0
    %1248 = vmatpush1.xpose.msra.mxu0 %v1203
    %1249 = vmatprep.subr.mxu0 0.0
    %1250 = vmatpush1.xpose.msra.mxu0 %v1206
    %1251 = vmatprep.subr.mxu0 0.0
    %1252 = vmatpush1.xpose.msra.mxu0 %v1209
    %1253 = vmatprep.subr.mxu0 0.0
    %1254 = vmatpush1.xpose.msra.mxu0 %v1212
    %1255 = vmatprep.subr.mxu0 0.0
    %1256 = vmatpush1.xpose.msra.mxu0 %v1215
    %1257 = vmatprep.subr.mxu0 0.0
    %1258 = vmatpush1.xpose.msra.mxu0 %v1218
    %1259 = vmatprep.subr.mxu0 0.0
    %1260 = vmatpush1.xpose.msra.mxu0 %v1221
    %1261 = vmatprep.subr.mxu0 0.0
    %1262 = vmatpush1.xpose.msra.mxu0 %v1224
    %1263 = vmatprep.subr.mxu0 0.0
    %1264 = vmatpush1.xpose.msra.mxu0 %v1227
    %1265 = vmatprep.subr.mxu0 0.0
    %1266 = vmatpush1.xpose.msra.mxu0 %v1230
    %1267 = vmatprep.subr.mxu0 0.0
    %1268 = vmatpush1.xpose.msra.mxu0 %v1233
    %1269 = vmatprep.subr.mxu0 0.0
    %1270 = vmatpush1.xpose.msra.mxu0 %v1236
    %1271 = vmatprep.subr.mxu0 0.0
    %1272 = vmatpush1.xpose.msra.mxu0 %v1239
    %1273 = vmatprep.subr.mxu0 0.0
    %1274 = vmatpush1.xpose.msra.mxu0 0.0
    %1275 = vmatprep.subr.mxu0 0.0
    %1276 = vmatpush1.xpose.msra.mxu0 0.0
    %1277 = vmatprep.subr.mxu0 0.0
    %1278 = vmatpush1.xpose.msra.mxu0 0.0
    %1279 = vmatprep.subr.mxu0 0.0
    %1280 = vmatpush1.xpose.msra.mxu0 0.0
    %1281 = vmatprep.subr.mxu0 0.0
    %1282 = vmatpush1.xpose.msra.mxu0 0.0
    %1283 = vmatprep.subr.mxu0 0.0
    %1284 = vmatpush1.xpose.msra.mxu0 0.0
    %1285 = vmatprep.subr.mxu0 0.0
    %1286 = vmatpush1.xpose.msra.mxu0 0.0
    %1287 = vmatprep.subr.mxu0 0.0
    %1288 = vmatpush1.xpose.msra.mxu0 0.0
    %1289 = vmatprep.subr.mxu0 0.0
    %1290 = vmatpush1.xpose.msra.mxu0 0.0
    %1291 = vmatprep.subr.mxu0 0.0
    %1292 = vmatpush1.xpose.msra.mxu0 0.0
    %1293 = vmatprep.subr.mxu0 0.0
    %1294 = vmatpush1.xpose.msra.mxu0 0.0
    %1295 = vmatprep.subr.mxu0 0.0
    %1296 = vmatpush1.xpose.msra.mxu0 0.0
    %1297 = vmatprep.subr.mxu0 0.0
    %1298 = vmatpush1.xpose.msra.mxu0 0.0
    %1299 = vmatprep.subr.mxu0 0.0
    %1300 = vmatpush1.xpose.msra.mxu0 0.0
    %1301 = vmatprep.subr.mxu0 0.0
    %1302 = vmatpush1.xpose.msra.mxu0 0.0
    %1303 = vmatprep.subr.mxu0 0.0
    %1304 = vmatpush1.xpose.msra.mxu0 0.0
    %1305 = vmatprep.mubr.f32.mxu0 0.0
    %1306 = vmatmul.mubr.f32.gmra.mrb[0].mxu0 %v1191
    %v1307 = vpop.f32.mrb[0].mxu0
    %v1308 = vadd.f32 0.0, %v1307
    %v1309 = vpop.f32.mrb[0].mxu0
    %1310 = vdwg.mxu0
    %v1312 = vsel %vm121, %v1158, 0
    %v1315 = vsel %vm121, %v1159, 0
    %v1318 = vsel %vm121, %v1160, 0
    %v1321 = vsel %vm121, %v1161, 0
    %v1324 = vsel %vm121, %v1162, 0
    %v1327 = vsel %vm121, %v1163, 0
    %v1330 = vsel %vm121, %v1164, 0
    %v1333 = vsel %vm121, %v1165, 0
    %v1336 = vsel %vm121, %v1166, 0
    %v1339 = vsel %vm121, %v1167, 0
    %v1342 = vsel %vm121, %v1168, 0
    %v1345 = vsel %vm121, %v1169, 0
    %v1348 = vsel %vm121, %v1170, 0
    %v1351 = vsel %vm121, %v1171, 0
    %v1354 = vsel %vm121, %v1172, 0
    %v1357 = vsel %vm121, %v1173, 0
    %1359 = vmatprep.subr.mxu0 0.0
    %1360 = vmatpush1.xpose.msra.mxu0 %v1312
    %1361 = vmatprep.subr.mxu0 0.0
    %1362 = vmatpush1.xpose.msra.mxu0 %v1315
    %1363 = vmatprep.subr.mxu0 0.0
    %1364 = vmatpush1.xpose.msra.mxu0 %v1318
    %1365 = vmatprep.subr.mxu0 0.0
    %1366 = vmatpush1.xpose.msra.mxu0 %v1321
    %1367 = vmatprep.subr.mxu0 0.0
    %1368 = vmatpush1.xpose.msra.mxu0 %v1324
    %1369 = vmatprep.subr.mxu0 0.0
    %1370 = vmatpush1.xpose.msra.mxu0 %v1327
    %1371 = vmatprep.subr.mxu0 0.0
    %1372 = vmatpush1.xpose.msra.mxu0 %v1330
    %1373 = vmatprep.subr.mxu0 0.0
    %1374 = vmatpush1.xpose.msra.mxu0 %v1333
    %1375 = vmatprep.subr.mxu0 0.0
    %1376 = vmatpush1.xpose.msra.mxu0 %v1336
    %1377 = vmatprep.subr.mxu0 0.0
    %1378 = vmatpush1.xpose.msra.mxu0 %v1339
    %1379 = vmatprep.subr.mxu0 0.0
    %1380 = vmatpush1.xpose.msra.mxu0 %v1342
    %1381 = vmatprep.subr.mxu0 0.0
    %1382 = vmatpush1.xpose.msra.mxu0 %v1345
    %1383 = vmatprep.subr.mxu0 0.0
    %1384 = vmatpush1.xpose.msra.mxu0 %v1348
    %1385 = vmatprep.subr.mxu0 0.0
    %1386 = vmatpush1.xpose.msra.mxu0 %v1351
    %1387 = vmatprep.subr.mxu0 0.0
    %1388 = vmatpush1.xpose.msra.mxu0 %v1354
    %1389 = vmatprep.subr.mxu0 0.0
    %1390 = vmatpush1.xpose.msra.mxu0 %v1357
    %1391 = vmatprep.subr.mxu0 0.0
    %1392 = vmatpush1.xpose.msra.mxu0 0.0
    %1393 = vmatprep.subr.mxu0 0.0
    %1394 = vmatpush1.xpose.msra.mxu0 0.0
    %1395 = vmatprep.subr.mxu0 0.0
    %1396 = vmatpush1.xpose.msra.mxu0 0.0
    %1397 = vmatprep.subr.mxu0 0.0
    %1398 = vmatpush1.xpose.msra.mxu0 0.0
    %1399 = vmatprep.subr.mxu0 0.0
    %1400 = vmatpush1.xpose.msra.mxu0 0.0
    %1401 = vmatprep.subr.mxu0 0.0
    %1402 = vmatpush1.xpose.msra.mxu0 0.0
    %1403 = vmatprep.subr.mxu0 0.0
    %1404 = vmatpush1.xpose.msra.mxu0 0.0
    %1405 = vmatprep.subr.mxu0 0.0
    %1406 = vmatpush1.xpose.msra.mxu0 0.0
    %1407 = vmatprep.subr.mxu0 0.0
    %1408 = vmatpush1.xpose.msra.mxu0 0.0
    %1409 = vmatprep.subr.mxu0 0.0
    %1410 = vmatpush1.xpose.msra.mxu0 0.0
    %1411 = vmatprep.subr.mxu0 0.0
    %1412 = vmatpush1.xpose.msra.mxu0 0.0
    %1413 = vmatprep.subr.mxu0 0.0
    %1414 = vmatpush1.xpose.msra.mxu0 0.0
    %1415 = vmatprep.subr.mxu0 0.0
    %1416 = vmatpush1.xpose.msra.mxu0 0.0
    %1417 = vmatprep.subr.mxu0 0.0
    %1418 = vmatpush1.xpose.msra.mxu0 0.0
    %1419 = vmatprep.subr.mxu0 0.0
    %1420 = vmatpush1.xpose.msra.mxu0 0.0
    %1421 = vmatprep.subr.mxu0 0.0
    %1422 = vmatpush1.xpose.msra.mxu0 0.0
    %1423 = vmatprep.mubr.f32.mxu0 0.0
    %1424 = vmatmul.mubr.f32.gmra.mrb[0].mxu0 %v1191
    %v1425 = vpop.f32.mrb[0].mxu0
    %v1426 = vadd.f32 0.0, %v1425
    %v1427 = vpop.f32.mrb[0].mxu0
    %1428 = vdwg.mxu0
    %1429 = vmatprep.subr.mxu0 0.0
    %1430 = vmatpush1.xpose.msra.mxu0 %v123
    %1431 = vmatprep.subr.mxu0 0.0
    %1432 = vmatpush1.xpose.msra.mxu0 %v126
    %1433 = vmatprep.subr.mxu0 0.0
    %1434 = vmatpush1.xpose.msra.mxu0 %v129
    %1435 = vmatprep.subr.mxu0 0.0
    %1436 = vmatpush1.xpose.msra.mxu0 %v132
    %1437 = vmatprep.subr.mxu0 0.0
    %1438 = vmatpush1.xpose.msra.mxu0 %v135
    %1439 = vmatprep.subr.mxu0 0.0
    %1440 = vmatpush1.xpose.msra.mxu0 %v138
    %1441 = vmatprep.subr.mxu0 0.0
    %1442 = vmatpush1.xpose.msra.mxu0 %v141
    %1443 = vmatprep.subr.mxu0 0.0
    %1444 = vmatpush1.xpose.msra.mxu0 %v144
    %1445 = vmatprep.subr.mxu0 0.0
    %1446 = vmatpush1.xpose.msra.mxu0 %v147
    %1447 = vmatprep.subr.mxu0 0.0
    %1448 = vmatpush1.xpose.msra.mxu0 %v150
    %1449 = vmatprep.subr.mxu0 0.0
    %1450 = vmatpush1.xpose.msra.mxu0 %v153
    %1451 = vmatprep.subr.mxu0 0.0
    %1452 = vmatpush1.xpose.msra.mxu0 %v156
    %1453 = vmatprep.subr.mxu0 0.0
    %1454 = vmatpush1.xpose.msra.mxu0 %v159
    %1455 = vmatprep.subr.mxu0 0.0
    %1456 = vmatpush1.xpose.msra.mxu0 %v162
    %1457 = vmatprep.subr.mxu0 0.0
    %1458 = vmatpush1.xpose.msra.mxu0 %v165
    %1459 = vmatprep.subr.mxu0 0.0
    %1460 = vmatpush1.xpose.msra.mxu0 %v168
    %1461 = vmatprep.subr.mxu0 0.0
    %1462 = vmatpush1.xpose.msra.mxu0 0.0
    %1463 = vmatprep.subr.mxu0 0.0
    %1464 = vmatpush1.xpose.msra.mxu0 0.0
    %1465 = vmatprep.subr.mxu0 0.0
    %1466 = vmatpush1.xpose.msra.mxu0 0.0
    %1467 = vmatprep.subr.mxu0 0.0
    %1468 = vmatpush1.xpose.msra.mxu0 0.0
    %1469 = vmatprep.subr.mxu0 0.0
    %1470 = vmatpush1.xpose.msra.mxu0 0.0
    %1471 = vmatprep.subr.mxu0 0.0
    %1472 = vmatpush1.xpose.msra.mxu0 0.0
    %1473 = vmatprep.subr.mxu0 0.0
    %1474 = vmatpush1.xpose.msra.mxu0 0.0
    %1475 = vmatprep.subr.mxu0 0.0
    %1476 = vmatpush1.xpose.msra.mxu0 0.0
    %1477 = vmatprep.subr.mxu0 0.0
    %1478 = vmatpush1.xpose.msra.mxu0 0.0
    %1479 = vmatprep.subr.mxu0 0.0
    %1480 = vmatpush1.xpose.msra.mxu0 0.0
    %1481 = vmatprep.subr.mxu0 0.0
    %1482 = vmatpush1.xpose.msra.mxu0 0.0
    %1483 = vmatprep.subr.mxu0 0.0
    %1484 = vmatpush1.xpose.msra.mxu0 0.0
    %1485 = vmatprep.subr.mxu0 0.0
    %1486 = vmatpush1.xpose.msra.mxu0 0.0
    %1487 = vmatprep.subr.mxu0 0.0
    %1488 = vmatpush1.xpose.msra.mxu0 0.0
    %1489 = vmatprep.subr.mxu0 0.0
    %1490 = vmatpush1.xpose.msra.mxu0 0.0
    %1491 = vmatprep.subr.mxu0 0.0
    %1492 = vmatpush1.xpose.msra.mxu0 0.0
    %1493 = vmatprep.mubr.f32.mxu0 0.0
    %1494 = vmatmul.mubr.f32.gmra.mrb[0].mxu0 %v1191
    %v1495 = vpop.f32.mrb[0].mxu0
    %v1496 = vadd.f32 0.0, %v1495
    %v1497 = vpop.f32.mrb[0].mxu0
    %1498 = vdwg.mxu0
    %1499 = vset.pattern.permute.xlu0 0
    %1500 = vperm.xlu0 %1499, %v116
    %v1501 = vpop.permute.xlu0 %1500
    %v1502 = vrot.slane %v1501, 4
    %v1504 = vadd.f32 %v1496, %v1502
    %v1505 = vmax.f32 %v1504, 0.0
    %v1507 = vrot.slane %v1426, 7
    %v1509 = vadd.f32 %v1505, %v1507
    %v1510 = vadd.f32 %v1509, 1e-06
    %1511 = vst [vmem:[#allocation10 - $0x1] sm:$0x2] %v1510
    %v1513 = vlaneseq
    %v1514 = vshrl.u32 %v1513, 7
    %v1515 = vsub.s32 0, %v1514
    %v1516 = vrot.slane %v107, %v1515
    %v1518 = vmul.f32 %v1505, %v1516
    %v1520 = vrot.slane %v1308, 7
    %v1522 = vadd.f32 %v1518, %v1520
    %1523 = vst [vmem:[#allocation10] sm:$0x2] %v1522
    // Predicated region
    $region42: #{tpu_custom_call.1} parent=1 // pred_check
      _
    $region43: #{tpu_custom_call.1} parent=1 // pred_check_branch
      %1525 = sbr.rel (0) target = $region45
    $region44: #{tpu_custom_call.1} parent=1 // pred_region
      %s1527 = ssub.s32 32, 32
      %1528 = vsyncadd [#allocation4], %s1527
      %s1530 = sshll.u32 [#allocation10], 4
      %s1531 = int_to_ptr.vmem [resolvable:$true] %s1530
      %1533 = dma.vmem_to_hbm [thread:$0]  %s1531, 32, %s6, [#allocation4]
    $region45: #{tpu_custom_call.1} parent=1 // pred_fallthru
      _
    // Predicated region
    $region46: #{tpu_custom_call.1} parent=1 // pred_check
      _
    $region47: #{tpu_custom_call.1} parent=1 // pred_check_branch
      %1535 = sbr.rel (0) target = $region49
    $region48: #{tpu_custom_call.1} parent=1 // pred_region
      %1536 = dma.done [#allocation4], 32
    $region49: #{tpu_custom_call.1} parent=1 // pred_fallthru
      _
    %1537 = vsyncpa [#allocation3], 1
    %1538 = vsyncpa [#allocation6], 1
    %1539 = vsyncpa [#allocation9], 1
    %1540 = vsyncpa [#allocation4], 1

</llo_original>
